<compile_context>
chip_gen: v6e
topology: v6e:2x2x1
jax: 0.10.0
libtpu: 0.0.40
codegen_flags: <defaults>
</compile_context>

<pallas_src>
import itertools
from math import comb

import jax
import jax.numpy as jnp
from jax.experimental import pallas as pl
from jax.experimental.pallas import tpu as pltpu

LANES = 128  # output packing width (one vreg row of f32 lanes)


def _round_up(n, m):
    return ((n + m - 1) // m) * m


def chi_kernel(x_ref, mu_ref, inv_scale_ref, a_ref, w_ref, o_ref):
    # x_ref:         [TILE_B, F_pad]       f32  input batch tile
    # mu_ref:        [1, F_pad]            f32  per-feature shift (median)
    # inv_scale_ref: [1, F_pad]            f32  per-feature 1/scale (recip. IQR)
    # a_ref:         [F_pad, M_pad]        f32  0/1 subset-membership matrix
    #                                           (rows >= F and cols >= M are 0)
    # w_ref:         [1, M_pad]            f32  output weights; col M holds the
    #                                           bias (hidden[:, M] == 1), cols
    #                                           > M are 0
    # o_ref:         [TILE_B//128, 128]    f32  packed outputs: batch row b of
    #                                           this tile lands at
    #                                           (b // 128, b % 128)

    # --- preprocessing + fused log(sigmoid) ---  (VPU + EUP)
    # log(sigmoid(z)) = -softplus(-z) = -(max(-z, 0) + log(1 + exp(-|z|)))
    # Exact and numerically stable: no clamp, no -inf, no NaN in the matmul.
    z = (x_ref[...] - mu_ref[...]) * inv_scale_ref[...]
    log_nodes = -(jnp.maximum(-z, 0.0)
                  + jnp.log(1.0 + jnp.exp(-jnp.abs(z))))      # [TILE_B, F_pad]

    # --- Algebraic n-ary op (subset products) as one log-space MXU matmul ---
    #   prod_{i in S} sigmoid(z_i) == exp( sum_i log(sigmoid(z_i)) * A[i, S] )
    # Padded A rows are zero -> padded features contribute nothing; padded A
    # columns are zero -> log_hidden == 0 -> hidden == 1 there (used for bias).
    log_hidden = jnp.dot(log_nodes, a_ref[...],
                         preferred_element_type=jnp.float32,
                         precision=jax.lax.Precision.HIGHEST)  # [TILE_B, M_pad]
    hidden = jnp.exp(log_hidden)                               # EUP

    # --- OutputLayer: weighted lane-reduce (VPU mul + XLU reduce) ---
    # Bias is folded into w_ref[0, M] against hidden[:, M] == 1, so this is the
    # full hidden @ w + b.  Remaining padded weight columns are zero.
    out_col = jnp.sum(hidden * w_ref[...], axis=-1, keepdims=True)  # [TILE_B, 1]

    # Pack 128 batch results per lane-dense output row (unmasked full-lane vst).
    o_ref[...] = out_col.reshape(o_ref.shape)


def chi_forward(x, mu, scale, a, w, b, *, max_tile_b=1024):
    B, F = x.shape
    M = a.shape[1]

    # TPU-friendly padding:
    #   F_pad : multiple of 8 (sublane)
    #   M_pad : multiple of 128 with >= 1 spare column reserved for the bias fold
    #   tile_b: multiple of 128 so the packed output block is (tile_b//128, 128).
    #           Small B -> single grid step (block == full array); large B ->
    #           tile_b == max_tile_b (>= 1024 => >= 8 output sublanes per block)
    #           and >= 2 grid steps so v7x megacore sharding engages.
    F_pad = _round_up(F, 8)
    M_pad = _round_up(M + 1, LANES)
    tile_b = min(max_tile_b, _round_up(B, LANES))
    B_pad = _round_up(B, tile_b)

    x_p = jnp.zeros((B_pad, F_pad), jnp.float32).at[:B, :F].set(
        jnp.asarray(x, jnp.float32))
    mu_p = jnp.zeros((1, F_pad), jnp.float32).at[:, :F].set(
        jnp.asarray(mu, jnp.float32).reshape(1, F))
    inv_scale_p = jnp.ones((1, F_pad), jnp.float32).at[:, :F].set(
        1.0 / jnp.asarray(scale, jnp.float32).reshape(1, F))
    # Membership matrix in f32: grid-invariant and tiny, no per-step convert.
    # Invariant (load-bearing): rows >= F and columns >= M are all zero.
    a_p = jnp.zeros((F_pad, M_pad), jnp.float32).at[:F, :M].set(
        jnp.asarray(a, jnp.float32))
    # Output weights as a single row; bias folded into padded column M.
    w_p = (jnp.zeros((1, M_pad), jnp.float32)
           .at[0, :M].set(jnp.asarray(w, jnp.float32).reshape(M))
           .at[0, M].set(jnp.asarray(b, jnp.float32).reshape(())))

    grid = (B_pad // tile_b,)
    out_rows = tile_b // LANES

    out_packed = pl.pallas_call(
        chi_kernel,
        out_shape=jax.ShapeDtypeStruct((B_pad // LANES, LANES), jnp.float32),
        grid=grid,
        in_specs=[
            pl.BlockSpec((tile_b, F_pad), lambda i: (i, 0)),     # x tile
            pl.BlockSpec((1, F_pad), lambda i: (0, 0)),          # mu
            pl.BlockSpec((1, F_pad), lambda i: (0, 0)),          # 1/scale
            pl.BlockSpec((F_pad, M_pad), lambda i: (0, 0)),      # A (f32 0/1)
            pl.BlockSpec((1, M_pad), lambda i: (0, 0)),          # w row (+bias)
        ],
        out_specs=pl.BlockSpec((out_rows, LANES), lambda i: (i, 0)),
        compiler_params=pltpu.CompilerParams(
            dimension_semantics=("parallel",)),
    )(x_p, mu_p, inv_scale_p, a_p, w_p)

    # Unpack: flat index b lives at out_packed[b // 128, b % 128].
    return out_packed.reshape(B_pad, 1)[:B]


def build_subset_matrix(num_features, add):
    """A[i, j] = 1 if feature i belongs to subset j (subsets of size 1..add)."""
    subsets = []
    for k in range(1, add + 1):
        subsets.extend(itertools.combinations(range(num_features), k))
    m = len(subsets)
    assert m == sum(comb(num_features, k) for k in range(1, add + 1))
    rows = [[0.0] * m for _ in range(num_features)]
    for j, s in enumerate(subsets):
        for i in s:
            rows[i][j] = 1.0
    return jnp.asarray(rows, dtype=jnp.float32)


def reference_forward(x, mu, scale, a, w, b):
    nodes = jax.nn.sigmoid((x - mu) / scale)
    terms = nodes[:, :, None] * a[None, :, :] + (1.0 - a[None, :, :])
    hidden = jnp.prod(terms, axis=1)
    return hidden @ w + b


if __name__ == "__main__":
    # Small, module-consistent shapes: batch=8, features=4, additivity_order=4.
    B, F = 8, 4
    add = F
    M = sum(comb(F, k) for k in range(1, add + 1))  # 15

    key = jax.random.PRNGKey(0)
    k_data, k_x, k_w, k_b = jax.random.split(key, 4)

    # Synthetic "dataloader.dataset" used only to derive percentile preprocessing.
    X_data = jax.random.normal(k_data, (64, F), dtype=jnp.float32) * 2.0 + 0.5
    q25 = jnp.percentile(X_data, 25.0, axis=0)
    q50 = jnp.percentile(X_data, 50.0, axis=0)
    q75 = jnp.percentile(X_data, 75.0, axis=0)
    mu = q50.reshape(1, F).astype(jnp.float32)
    scale = (q75 - q25).reshape(1, F).astype(jnp.float32) + 1e-6

    # Subset-membership matrix for the Algebraic n-ary operation.
    a = build_subset_matrix(F, add)                       # [F, M]

    # Deterministic OutputLayer parameters.
    w = (jax.random.uniform(k_w, (M, 1), dtype=jnp.float32) * 0.2 + 0.01)
    b = jax.random.normal(k_b, (1, 1), dtype=jnp.float32) * 0.1

    # Example input batch.
    x = jax.random.normal(k_x, (B, F), dtype=jnp.float32) * 2.0 + 0.5

    out = chi_forward(x, mu, scale, a, w, b)
    out = jax.block_until_ready(out)

    ref = reference_forward(x, mu, scale, a, w, b)
    assert out.shape == (B, 1)
    assert jnp.allclose(out, ref, atol=1e-5, rtol=1e-5), "mismatch vs reference"

    print("KERNEL_OK")
</pallas_src>

<mosaic_0001>
module attributes {stable_mosaic.version = 11 : i64} {
  func.func @chi_kernel(%arg0: i32, %arg1: memref<128x8xf32, #tpu.memory_space<vmem>>, %arg2: memref<1x8xf32, #tpu.memory_space<vmem>>, %arg3: memref<1x8xf32, #tpu.memory_space<vmem>>, %arg4: memref<8x128xf32, #tpu.memory_space<vmem>>, %arg5: memref<1x128xf32, #tpu.memory_space<vmem>>, %arg6: memref<1x128xf32, #tpu.memory_space<vmem>>) attributes {dimension_semantics = [#tpu.dimension_semantics<parallel>], iteration_bounds = array<i64: 1>, scalar_prefetch = 0 : i64, scratch_operands = 0 : i64, tpu.core_type = #tpu.core_type<tc>, window_params = [{transform_indices = @transform_0, window_bounds = array<i64: 128, 8>}, {pipeline_mode = #tpu.pipeline_mode<synchronous>, transform_indices = @transform_1, window_bounds = array<i64: 1, 8>}, {pipeline_mode = #tpu.pipeline_mode<synchronous>, transform_indices = @transform_2, window_bounds = array<i64: 1, 8>}, {pipeline_mode = #tpu.pipeline_mode<synchronous>, transform_indices = @transform_3, window_bounds = array<i64: 8, 128>}, {pipeline_mode = #tpu.pipeline_mode<synchronous>, transform_indices = @transform_4, window_bounds = array<i64: 1, 128>}, {transform_indices = @transform_5, window_bounds = array<i64: 1, 128>}]} {
    %c0 = arith.constant 0 : index
    %c0_0 = arith.constant 0 : index
    %0 = vector.load %arg1[%c0, %c0_0] : memref<128x8xf32, #tpu.memory_space<vmem>>, vector<128x8xf32>
    %c0_1 = arith.constant 0 : index
    %c0_2 = arith.constant 0 : index
    %1 = vector.load %arg2[%c0_1, %c0_2] : memref<1x8xf32, #tpu.memory_space<vmem>>, vector<1x8xf32>
    %2 = vector.broadcast %1 : vector<1x8xf32> to vector<128x8xf32>
    %3 = arith.subf %0, %2 : vector<128x8xf32>
    %c0_3 = arith.constant 0 : index
    %c0_4 = arith.constant 0 : index
    %4 = vector.load %arg3[%c0_3, %c0_4] : memref<1x8xf32, #tpu.memory_space<vmem>>, vector<1x8xf32>
    %5 = vector.broadcast %4 : vector<1x8xf32> to vector<128x8xf32>
    %6 = arith.mulf %3, %5 : vector<128x8xf32>
    %cst = arith.constant 0.000000e+00 : f32
    %7 = vector.broadcast %cst : f32 to vector<128x8xf32>
    %8 = arith.subf %7, %6 : vector<128x8xf32>
    %cst_5 = arith.constant 0.000000e+00 : f32
    %9 = vector.broadcast %cst_5 : f32 to vector<128x8xf32>
    %10 = arith.maximumf %8, %9 : vector<128x8xf32>
    %11 = math.absf %6 : vector<128x8xf32>
    %cst_6 = arith.constant 0.000000e+00 : f32
    %12 = vector.broadcast %cst_6 : f32 to vector<128x8xf32>
    %13 = arith.subf %12, %11 : vector<128x8xf32>
    %14 = math.exp %13 : vector<128x8xf32>
    %cst_7 = arith.constant 1.000000e+00 : f32
    %15 = vector.broadcast %cst_7 : f32 to vector<128x8xf32>
    %16 = arith.addf %15, %14 : vector<128x8xf32>
    %17 = math.log %16 : vector<128x8xf32>
    %18 = arith.addf %10, %17 : vector<128x8xf32>
    %cst_8 = arith.constant 0.000000e+00 : f32
    %19 = vector.broadcast %cst_8 : f32 to vector<128x8xf32>
    %20 = arith.subf %19, %18 : vector<128x8xf32>
    %c0_9 = arith.constant 0 : index
    %c0_10 = arith.constant 0 : index
    %21 = vector.load %arg4[%c0_9, %c0_10] : memref<8x128xf32, #tpu.memory_space<vmem>>, vector<8x128xf32>
    %cst_11 = arith.constant dense<0.000000e+00> : vector<128x128xf32>
    %22 = tpu.matmul %20, %21, %cst_11 {dimension_numbers = #tpu.dot_dimension_numbers<[1], [0], [0], [1], [0, 0, 1, 1], [], []>, precision = #tpu.contract_precision<fp32>} : vector<128x8xf32>, vector<8x128xf32>, vector<128x128xf32> -> vector<128x128xf32>
    %23 = math.exp %22 : vector<128x128xf32>
    %c0_12 = arith.constant 0 : index
    %c0_13 = arith.constant 0 : index
    %24 = vector.load %arg5[%c0_12, %c0_13] : memref<1x128xf32, #tpu.memory_space<vmem>>, vector<1x128xf32>
    %25 = vector.broadcast %24 : vector<1x128xf32> to vector<128x128xf32>
    %26 = arith.mulf %23, %25 : vector<128x128xf32>
    %cst_14 = arith.constant dense<0.000000e+00> : vector<128xf32>
    %27 = vector.multi_reduction <add>, %26, %cst_14 [1] : vector<128x128xf32> to vector<128xf32>
    %28 = vector.shape_cast %27 : vector<128xf32> to vector<128x1xf32>
    %29 = vector.shape_cast %28 : vector<128x1xf32> to vector<1x128xf32>
    %c0_15 = arith.constant 0 : index
    %c0_16 = arith.constant 0 : index
    %30 = vector.load %arg6[%c0_15, %c0_16] : memref<1x128xf32, #tpu.memory_space<vmem>>, vector<1x128xf32>
    tpu.vector_store %arg6[%c0_15, %c0_16], %29 {strides = array<i32>} : memref<1x128xf32, #tpu.memory_space<vmem>>, vector<1x128xf32>,
    return
  }
  func.func @transform_0(%arg0: i32) -> (i32, i32) {
    %c0_i32 = arith.constant 0 : i32
    %c0_i32_0 = arith.constant 0 : i32
    return %arg0, %c0_i32 : i32, i32
  }
  func.func @transform_1(%arg0: i32) -> (i32, i32) {
    %c0_i32 = arith.constant 0 : i32
    %c0_i32_0 = arith.constant 0 : i32
    %c0_i32_1 = arith.constant 0 : i32
    return %c0_i32, %c0_i32_0 : i32, i32
  }
  func.func @transform_2(%arg0: i32) -> (i32, i32) {
    %c0_i32 = arith.constant 0 : i32
    %c0_i32_0 = arith.constant 0 : i32
    %c0_i32_1 = arith.constant 0 : i32
    return %c0_i32, %c0_i32_0 : i32, i32
  }
  func.func @transform_3(%arg0: i32) -> (i32, i32) {
    %c0_i32 = arith.constant 0 : i32
    %c0_i32_0 = arith.constant 0 : i32
    %c0_i32_1 = arith.constant 0 : i32
    return %c0_i32, %c0_i32_0 : i32, i32
  }
  func.func @transform_4(%arg0: i32) -> (i32, i32) {
    %c0_i32 = arith.constant 0 : i32
    %c0_i32_0 = arith.constant 0 : i32
    %c0_i32_1 = arith.constant 0 : i32
    return %c0_i32, %c0_i32_0 : i32, i32
  }
  func.func @transform_5(%arg0: i32) -> (i32, i32) {
    %c0_i32 = arith.constant 0 : i32
    %c0_i32_0 = arith.constant 0 : i32
    return %arg0, %c0_i32 : i32, i32
  }
}

</mosaic_0001>

<llo_original>
// kernel: tpu_custom_call.1
$region0: #{tpu_custom_call.1}
  #allocation0 [shape = 'u32[]', space=smem, size = 0x4, offset = 0x4, fixed_abs, tag = 'smem constant byte address 0x4 - core index']
  #allocation1 [shape = 'u32[144,128]{1,0:T(1,128)}', space=vmem, size = 0x12000, scoped, tag = 'internal scratch']
  %s0 = inlined_call_operand.vmem [shape: f32[128,8], index: 0, kind: input, shape index: {}]
  %s1 = inlined_call_operand.vmem [shape: f32[1,8], index: 1, kind: input, shape index: {}]
  %s2 = inlined_call_operand.vmem [shape: f32[1,8], index: 2, kind: input, shape index: {}]
  %s3 = inlined_call_operand.vmem [shape: f32[8,128], index: 3, kind: input, shape index: {}]
  %s4 = inlined_call_operand.vmem [shape: f32[1,128], index: 4, kind: input, shape index: {}]
  %s5 = inlined_call_operand.hbm [shape: f32[1,128], index: 5, kind: output, shape index: {}]
  %s6 = sld [smem:[#allocation0]]
  $region30: #{tpu_custom_call.1} parent=0
    _
  %s8 = ssub.s32 1, %s6
  %s9 = scalar_select 0, %s8, %s6
  $region1: #{tpu_custom_call.1} parent=0
    #allocation2 [shape = 'u8[512]{0}', space=vmem, size = 0x400, scoped, tag = 'output window, operand 0, single buffered']
    #allocation3 [shape = 's32[1]{0}', space=sflag, size = 0x4, scoped, tag = 'scoped memory for tpu_custom_call.1']
    %10 = vsyncpa [#allocation3], 0
    // Predicated region
    $region2: #{tpu_custom_call.1} parent=1 // pred_check
      _
    $region3: #{tpu_custom_call.1} parent=1 // pred_check_branch
      %12 = sbr.rel (0) target = $region5
    $region4: #{tpu_custom_call.1} parent=1 // pred_region
      _
    $region5: #{tpu_custom_call.1} parent=1 // pred_fallthru
      _
    // Predicated region
    $region6: #{tpu_custom_call.1} parent=1 // pred_check
      _
    $region7: #{tpu_custom_call.1} parent=1 // pred_check_branch
      %14 = sbr.rel (0) target = $region9
    $region8: #{tpu_custom_call.1} parent=1 // pred_region
      _
    $region9: #{tpu_custom_call.1} parent=1 // pred_fallthru
      _
    // Predicated region
    $region10: #{tpu_custom_call.1} parent=1 // pred_check
      _
    $region11: #{tpu_custom_call.1} parent=1 // pred_check_branch
      %16 = sbr.rel (0) target = $region13
    $region12: #{tpu_custom_call.1} parent=1 // pred_region
      _
    $region13: #{tpu_custom_call.1} parent=1 // pred_fallthru
      _
    // Predicated region
    $region14: #{tpu_custom_call.1} parent=1 // pred_check
      _
    $region15: #{tpu_custom_call.1} parent=1 // pred_check_branch
      %18 = sbr.rel (0) target = $region17
    $region16: #{tpu_custom_call.1} parent=1 // pred_region
      _
    $region17: #{tpu_custom_call.1} parent=1 // pred_fallthru
      _
    // Predicated region
    $region18: #{tpu_custom_call.1} parent=1 // pred_check
      _
    $region19: #{tpu_custom_call.1} parent=1 // pred_check_branch
      %20 = sbr.rel (0) target = $region21
    $region20: #{tpu_custom_call.1} parent=1 // pred_region
      _
    $region21: #{tpu_custom_call.1} parent=1 // pred_fallthru
      _
    %v21 = vld [vmem:[%s0] sm:$0xff]
    %v22 = vld [vmem:[%s0 + $0x8] sm:$0xff]
    %v23 = vld [vmem:[%s0 + $0x10] sm:$0xff]
    %v24 = vld [vmem:[%s0 + $0x18] sm:$0xff]
    %v25 = vld [vmem:[%s0 + $0x20] sm:$0xff]
    %v26 = vld [vmem:[%s0 + $0x28] sm:$0xff]
    %v27 = vld [vmem:[%s0 + $0x30] sm:$0xff]
    %v28 = vld [vmem:[%s0 + $0x38] sm:$0xff]
    %v29 = vld [vmem:[%s0 + $0x40] sm:$0xff]
    %v30 = vld [vmem:[%s0 + $0x48] sm:$0xff]
    %v31 = vld [vmem:[%s0 + $0x50] sm:$0xff]
    %v32 = vld [vmem:[%s0 + $0x58] sm:$0xff]
    %v33 = vld [vmem:[%s0 + $0x60] sm:$0xff]
    %v34 = vld [vmem:[%s0 + $0x68] sm:$0xff]
    %v35 = vld [vmem:[%s0 + $0x70] sm:$0xff]
    %v36 = vld [vmem:[%s0 + $0x78] sm:$0xff]
    %v37 = vld [vmem:[%s1] sm:$0x1]
    %v39 = vlaneseq
    %v40 = vshrl.u32 %v39, 7
    %v41 = vsub.s32 0, %v40
    %v42 = vrot.slane %v37, %v41
    %v44 = vsub.f32 %v21, %v42
    %v45 = vsub.f32 %v22, %v42
    %v46 = vsub.f32 %v23, %v42
    %v47 = vsub.f32 %v24, %v42
    %v48 = vsub.f32 %v25, %v42
    %v49 = vsub.f32 %v26, %v42
    %v50 = vsub.f32 %v27, %v42
    %v51 = vsub.f32 %v28, %v42
    %v52 = vsub.f32 %v29, %v42
    %v53 = vsub.f32 %v30, %v42
    %v54 = vsub.f32 %v31, %v42
    %v55 = vsub.f32 %v32, %v42
    %v56 = vsub.f32 %v33, %v42
    %v57 = vsub.f32 %v34, %v42
    %v58 = vsub.f32 %v35, %v42
    %v59 = vsub.f32 %v36, %v42
    %v60 = vld [vmem:[%s2] sm:$0x1]
    %v62 = vlaneseq
    %v63 = vshrl.u32 %v62, 7
    %v64 = vsub.s32 0, %v63
    %v65 = vrot.slane %v60, %v64
    %v67 = vmul.f32 %v44, %v65
    %v68 = vmul.f32 %v45, %v65
    %v69 = vmul.f32 %v46, %v65
    %v70 = vmul.f32 %v47, %v65
    %v71 = vmul.f32 %v48, %v65
    %v72 = vmul.f32 %v49, %v65
    %v73 = vmul.f32 %v50, %v65
    %v74 = vmul.f32 %v51, %v65
    %v75 = vmul.f32 %v52, %v65
    %v76 = vmul.f32 %v53, %v65
    %v77 = vmul.f32 %v54, %v65
    %v78 = vmul.f32 %v55, %v65
    %v79 = vmul.f32 %v56, %v65
    %v80 = vmul.f32 %v57, %v65
    %v81 = vmul.f32 %v58, %v65
    %v82 = vmul.f32 %v59, %v65
    %v83 = vsub.f32 0.0, %v67
    %v84 = vsub.f32 0.0, %v68
    %v85 = vsub.f32 0.0, %v69
    %v86 = vsub.f32 0.0, %v70
    %v87 = vsub.f32 0.0, %v71
    %v88 = vsub.f32 0.0, %v72
    %v89 = vsub.f32 0.0, %v73
    %v90 = vsub.f32 0.0, %v74
    %v91 = vsub.f32 0.0, %v75
    %v92 = vsub.f32 0.0, %v76
    %v93 = vsub.f32 0.0, %v77
    %v94 = vsub.f32 0.0, %v78
    %v95 = vsub.f32 0.0, %v79
    %v96 = vsub.f32 0.0, %v80
    %v97 = vsub.f32 0.0, %v81
    %v98 = vsub.f32 0.0, %v82
    %v99 = vmax.f32 %v83, 0.0
    %v100 = vmax.f32 %v84, 0.0
    %v101 = vmax.f32 %v85, 0.0
    %v102 = vmax.f32 %v86, 0.0
    %v103 = vmax.f32 %v87, 0.0
    %v104 = vmax.f32 %v88, 0.0
    %v105 = vmax.f32 %v89, 0.0
    %v106 = vmax.f32 %v90, 0.0
    %v107 = vmax.f32 %v91, 0.0
    %v108 = vmax.f32 %v92, 0.0
    %v109 = vmax.f32 %v93, 0.0
    %v110 = vmax.f32 %v94, 0.0
    %v111 = vmax.f32 %v95, 0.0
    %v112 = vmax.f32 %v96, 0.0
    %v113 = vmax.f32 %v97, 0.0
    %v114 = vmax.f32 %v98, 0.0
    %v115 = vand.u32 2147483647, %v67
    %v116 = vand.u32 2147483647, %v68
    %v117 = vand.u32 2147483647, %v69
    %v118 = vand.u32 2147483647, %v70
    %v119 = vand.u32 2147483647, %v71
    %v120 = vand.u32 2147483647, %v72
    %v121 = vand.u32 2147483647, %v73
    %v122 = vand.u32 2147483647, %v74
    %v123 = vand.u32 2147483647, %v75
    %v124 = vand.u32 2147483647, %v76
    %v125 = vand.u32 2147483647, %v77
    %v126 = vand.u32 2147483647, %v78
    %v127 = vand.u32 2147483647, %v79
    %v128 = vand.u32 2147483647, %v80
    %v129 = vand.u32 2147483647, %v81
    %v130 = vand.u32 2147483647, %v82
    %v131 = vsub.f32 0.0, %v115
    %v132 = vsub.f32 0.0, %v116
    %v133 = vsub.f32 0.0, %v117
    %v134 = vsub.f32 0.0, %v118
    %v135 = vsub.f32 0.0, %v119
    %v136 = vsub.f32 0.0, %v120
    %v137 = vsub.f32 0.0, %v121
    %v138 = vsub.f32 0.0, %v122
    %v139 = vsub.f32 0.0, %v123
    %v140 = vsub.f32 0.0, %v124
    %v141 = vsub.f32 0.0, %v125
    %v142 = vsub.f32 0.0, %v126
    %v143 = vsub.f32 0.0, %v127
    %v144 = vsub.f32 0.0, %v128
    %v145 = vsub.f32 0.0, %v129
    %v146 = vsub.f32 0.0, %v130
    %v147 = vmul.f32 %v131, 1.442695
    %v148 = vpow.pop %v147
    %v149 = vmul.f32 %v132, 1.442695
    %v150 = vpow.pop %v149
    %v151 = vmul.f32 %v133, 1.442695
    %v152 = vpow.pop %v151
    %v153 = vmul.f32 %v134, 1.442695
    %v154 = vpow.pop %v153
    %v155 = vmul.f32 %v135, 1.442695
    %v156 = vpow.pop %v155
    %v157 = vmul.f32 %v136, 1.442695
    %v158 = vpow.pop %v157
    %v159 = vmul.f32 %v137, 1.442695
    %v160 = vpow.pop %v159
    %v161 = vmul.f32 %v138, 1.442695
    %v162 = vpow.pop %v161
    %v163 = vmul.f32 %v139, 1.442695
    %v164 = vpow.pop %v163
    %v165 = vmul.f32 %v140, 1.442695
    %v166 = vpow.pop %v165
    %v167 = vmul.f32 %v141, 1.442695
    %v168 = vpow.pop %v167
    %v169 = vmul.f32 %v142, 1.442695
    %v170 = vpow.pop %v169
    %v171 = vmul.f32 %v143, 1.442695
    %v172 = vpow.pop %v171
    %v173 = vmul.f32 %v144, 1.442695
    %v174 = vpow.pop %v173
    %v175 = vmul.f32 %v145, 1.442695
    %v176 = vpow.pop %v175
    %v177 = vmul.f32 %v146, 1.442695
    %v178 = vpow.pop %v177
    %v179 = vadd.f32 %v148, 1.0
    %v180 = vadd.f32 %v150, 1.0
    %v181 = vadd.f32 %v152, 1.0
    %v182 = vadd.f32 %v154, 1.0
    %v183 = vadd.f32 %v156, 1.0
    %v184 = vadd.f32 %v158, 1.0
    %v185 = vadd.f32 %v160, 1.0
    %v186 = vadd.f32 %v162, 1.0
    %v187 = vadd.f32 %v164, 1.0
    %v188 = vadd.f32 %v166, 1.0
    %v189 = vadd.f32 %v168, 1.0
    %v190 = vadd.f32 %v170, 1.0
    %v191 = vadd.f32 %v172, 1.0
    %v192 = vadd.f32 %v174, 1.0
    %v193 = vadd.f32 %v176, 1.0
    %v194 = vadd.f32 %v178, 1.0
    %v195 = vlog2.pop %v179
    %v196 = vmul.f32 %v195, 0.6931472
    %v197 = vlog2.pop %v180
    %v198 = vmul.f32 %v197, 0.6931472
    %v199 = vlog2.pop %v181
    %v200 = vmul.f32 %v199, 0.6931472
    %v201 = vlog2.pop %v182
    %v202 = vmul.f32 %v201, 0.6931472
    %v203 = vlog2.pop %v183
    %v204 = vmul.f32 %v203, 0.6931472
    %v205 = vlog2.pop %v184
    %v206 = vmul.f32 %v205, 0.6931472
    %v207 = vlog2.pop %v185
    %v208 = vmul.f32 %v207, 0.6931472
    %v209 = vlog2.pop %v186
    %v210 = vmul.f32 %v209, 0.6931472
    %v211 = vlog2.pop %v187
    %v212 = vmul.f32 %v211, 0.6931472
    %v213 = vlog2.pop %v188
    %v214 = vmul.f32 %v213, 0.6931472
    %v215 = vlog2.pop %v189
    %v216 = vmul.f32 %v215, 0.6931472
    %v217 = vlog2.pop %v190
    %v218 = vmul.f32 %v217, 0.6931472
    %v219 = vlog2.pop %v191
    %v220 = vmul.f32 %v219, 0.6931472
    %v221 = vlog2.pop %v192
    %v222 = vmul.f32 %v221, 0.6931472
    %v223 = vlog2.pop %v193
    %v224 = vmul.f32 %v223, 0.6931472
    %v225 = vlog2.pop %v194
    %v226 = vmul.f32 %v225, 0.6931472
    %v227 = vadd.f32 %v99, %v196
    %v228 = vadd.f32 %v100, %v198
    %v229 = vadd.f32 %v101, %v200
    %v230 = vadd.f32 %v102, %v202
    %v231 = vadd.f32 %v103, %v204
    %v232 = vadd.f32 %v104, %v206
    %v233 = vadd.f32 %v105, %v208
    %v234 = vadd.f32 %v106, %v210
    %v235 = vadd.f32 %v107, %v212
    %v236 = vadd.f32 %v108, %v214
    %v237 = vadd.f32 %v109, %v216
    %v238 = vadd.f32 %v110, %v218
    %v239 = vadd.f32 %v111, %v220
    %v240 = vadd.f32 %v112, %v222
    %v241 = vadd.f32 %v113, %v224
    %v242 = vadd.f32 %v114, %v226
    %v243 = vsub.f32 0.0, %v227
    %v244 = vsub.f32 0.0, %v228
    %v245 = vsub.f32 0.0, %v229
    %v246 = vsub.f32 0.0, %v230
    %v247 = vsub.f32 0.0, %v231
    %v248 = vsub.f32 0.0, %v232
    %v249 = vsub.f32 0.0, %v233
    %v250 = vsub.f32 0.0, %v234
    %v251 = vsub.f32 0.0, %v235
    %v252 = vsub.f32 0.0, %v236
    %v253 = vsub.f32 0.0, %v237
    %v254 = vsub.f32 0.0, %v238
    %v255 = vsub.f32 0.0, %v239
    %v256 = vsub.f32 0.0, %v240
    %v257 = vsub.f32 0.0, %v241
    %v258 = vsub.f32 0.0, %v242
    %v259 = vld [vmem:[%s3] sm:$0xff]
    %vm260 = vcmask 64512
    %v262 = vsel %vm260, %v243, 0
    %v265 = vsel %vm260, %v244, 0
    %v268 = vsel %vm260, %v245, 0
    %v271 = vsel %vm260, %v246, 0
    %v274 = vsel %vm260, %v247, 0
    %v277 = vsel %vm260, %v248, 0
    %v280 = vsel %vm260, %v249, 0
    %v283 = vsel %vm260, %v250, 0
    %v286 = vsel %vm260, %v251, 0
    %v289 = vsel %vm260, %v252, 0
    %v292 = vsel %vm260, %v253, 0
    %v295 = vsel %vm260, %v254, 0
    %v298 = vsel %vm260, %v255, 0
    %v301 = vsel %vm260, %v256, 0
    %v304 = vsel %vm260, %v257, 0
    %v307 = vsel %vm260, %v258, 0
    %309 = vmatprep.subr.mxu0 0.0
    %310 = vmatpush1.msra.mxu0 0.0
    %311 = vmatprep.subr.mxu0 0.0
    %312 = vmatpush1.msra.mxu0 0.0
    %313 = vmatprep.subr.mxu0 0.0
    %314 = vmatpush1.msra.mxu0 0.0
    %315 = vmatprep.subr.mxu0 0.0
    %316 = vmatpush1.msra.mxu0 0.0
    %317 = vmatprep.subr.mxu0 0.0
    %318 = vmatpush1.msra.mxu0 0.0
    %319 = vmatprep.subr.mxu0 0.0
    %320 = vmatpush1.msra.mxu0 0.0
    %321 = vmatprep.subr.mxu0 0.0
    %322 = vmatpush1.msra.mxu0 0.0
    %323 = vmatprep.subr.mxu0 0.0
    %324 = vmatpush1.msra.mxu0 0.0
    %325 = vmatprep.subr.mxu0 0.0
    %326 = vmatpush1.msra.mxu0 0.0
    %327 = vmatprep.subr.mxu0 0.0
    %328 = vmatpush1.msra.mxu0 0.0
    %329 = vmatprep.subr.mxu0 0.0
    %330 = vmatpush1.msra.mxu0 0.0
    %331 = vmatprep.subr.mxu0 0.0
    %332 = vmatpush1.msra.mxu0 0.0
    %333 = vmatprep.subr.mxu0 0.0
    %334 = vmatpush1.msra.mxu0 0.0
    %335 = vmatprep.subr.mxu0 0.0
    %336 = vmatpush1.msra.mxu0 0.0
    %337 = vmatprep.subr.mxu0 0.0
    %338 = vmatpush1.msra.mxu0 0.0
    %339 = vmatprep.subr.mxu0 0.0
    %v340 = vand.u32 %v259, 4294901760
    %341 = vmatpush1.msra.mxu0 %v340
    %342 = vmatprep.subr.mxu0 0.0
    %343 = vmatpush2.msra.mxu0 0.0
    %344 = vmatprep.subr.mxu0 0.0
    %345 = vmatpush2.msra.mxu0 0.0
    %346 = vmatprep.subr.mxu0 0.0
    %347 = vmatpush2.msra.mxu0 0.0
    %348 = vmatprep.subr.mxu0 0.0
    %349 = vmatpush2.msra.mxu0 0.0
    %350 = vmatprep.subr.mxu0 0.0
    %351 = vmatpush2.msra.mxu0 0.0
    %352 = vmatprep.subr.mxu0 0.0
    %353 = vmatpush2.msra.mxu0 0.0
    %354 = vmatprep.subr.mxu0 0.0
    %355 = vmatpush2.msra.mxu0 0.0
    %356 = vmatprep.subr.mxu0 0.0
    %357 = vmatpush2.msra.mxu0 0.0
    %358 = vmatprep.subr.mxu0 0.0
    %359 = vmatpush2.msra.mxu0 0.0
    %360 = vmatprep.subr.mxu0 0.0
    %361 = vmatpush2.msra.mxu0 0.0
    %362 = vmatprep.subr.mxu0 0.0
    %363 = vmatpush2.msra.mxu0 0.0
    %364 = vmatprep.subr.mxu0 0.0
    %365 = vmatpush2.msra.mxu0 0.0
    %366 = vmatprep.subr.mxu0 0.0
    %367 = vmatpush2.msra.mxu0 0.0
    %368 = vmatprep.subr.mxu0 0.0
    %369 = vmatpush2.msra.mxu0 0.0
    %370 = vmatprep.subr.mxu0 0.0
    %371 = vmatpush2.msra.mxu0 0.0
    %372 = vmatprep.subr.mxu0 0.0
    %373 = vmatpush2.msra.mxu0 0.0
    %374 = vmatprep.mubr.f32.mxu0 0.0
    %v375 = vand.u32 %v262, 4294901760
    %v376 = vsub.f32 %v262, %v375
    %v377 = vand.u32 %v376, 4294901760
    %v378 = vsub.f32 %v376, %v377
    %v379 = vand.u32 %v378, 4294901760
    %380 = vmatmul.mubr.f32.gmra.mxu0 %v379
    %v381 = vpop.f32.mrf.mxu0
    %v382 = vadd.f32 0.0, %v381
    %v383 = vpop.f32.mrf.mxu0
    %384 = vmatprep.mubr.f32.mxu0 0.0
    %v385 = vand.u32 %v265, 4294901760
    %v386 = vsub.f32 %v265, %v385
    %v387 = vand.u32 %v386, 4294901760
    %v388 = vsub.f32 %v386, %v387
    %v389 = vand.u32 %v388, 4294901760
    %390 = vmatmul.mubr.f32.gmra.mxu0 %v389
    %v391 = vpop.f32.mrf.mxu0
    %v392 = vadd.f32 0.0, %v391
    %v393 = vpop.f32.mrf.mxu0
    %394 = vmatprep.mubr.f32.mxu0 0.0
    %v395 = vand.u32 %v268, 4294901760
    %v396 = vsub.f32 %v268, %v395
    %v397 = vand.u32 %v396, 4294901760
    %v398 = vsub.f32 %v396, %v397
    %v399 = vand.u32 %v398, 4294901760
    %400 = vmatmul.mubr.f32.gmra.mxu0 %v399
    %v401 = vpop.f32.mrf.mxu0
    %v402 = vadd.f32 0.0, %v401
    %v403 = vpop.f32.mrf.mxu0
    %404 = vmatprep.mubr.f32.mxu0 0.0
    %v405 = vand.u32 %v271, 4294901760
    %v406 = vsub.f32 %v271, %v405
    %v407 = vand.u32 %v406, 4294901760
    %v408 = vsub.f32 %v406, %v407
    %v409 = vand.u32 %v408, 4294901760
    %410 = vmatmul.mubr.f32.gmra.mxu0 %v409
    %v411 = vpop.f32.mrf.mxu0
    %v412 = vadd.f32 0.0, %v411
    %v413 = vpop.f32.mrf.mxu0
    %414 = vmatprep.mubr.f32.mxu0 0.0
    %v415 = vand.u32 %v274, 4294901760
    %v416 = vsub.f32 %v274, %v415
    %v417 = vand.u32 %v416, 4294901760
    %v418 = vsub.f32 %v416, %v417
    %v419 = vand.u32 %v418, 4294901760
    %420 = vmatmul.mubr.f32.gmra.mxu0 %v419
    %v421 = vpop.f32.mrf.mxu0
    %v422 = vadd.f32 0.0, %v421
    %v423 = vpop.f32.mrf.mxu0
    %424 = vmatprep.mubr.f32.mxu0 0.0
    %v425 = vand.u32 %v277, 4294901760
    %v426 = vsub.f32 %v277, %v425
    %v427 = vand.u32 %v426, 4294901760
    %v428 = vsub.f32 %v426, %v427
    %v429 = vand.u32 %v428, 4294901760
    %430 = vmatmul.mubr.f32.gmra.mxu0 %v429
    %v431 = vpop.f32.mrf.mxu0
    %v432 = vadd.f32 0.0, %v431
    %v433 = vpop.f32.mrf.mxu0
    %434 = vmatprep.mubr.f32.mxu0 0.0
    %v435 = vand.u32 %v280, 4294901760
    %v436 = vsub.f32 %v280, %v435
    %v437 = vand.u32 %v436, 4294901760
    %v438 = vsub.f32 %v436, %v437
    %v439 = vand.u32 %v438, 4294901760
    %440 = vmatmul.mubr.f32.gmra.mxu0 %v439
    %v441 = vpop.f32.mrf.mxu0
    %v442 = vadd.f32 0.0, %v441
    %v443 = vpop.f32.mrf.mxu0
    %444 = vmatprep.mubr.f32.mxu0 0.0
    %v445 = vand.u32 %v283, 4294901760
    %v446 = vsub.f32 %v283, %v445
    %v447 = vand.u32 %v446, 4294901760
    %v448 = vsub.f32 %v446, %v447
    %v449 = vand.u32 %v448, 4294901760
    %450 = vmatmul.mubr.f32.gmra.mxu0 %v449
    %v451 = vpop.f32.mrf.mxu0
    %v452 = vadd.f32 0.0, %v451
    %v453 = vpop.f32.mrf.mxu0
    %454 = vmatprep.mubr.f32.mxu0 0.0
    %v455 = vand.u32 %v286, 4294901760
    %v456 = vsub.f32 %v286, %v455
    %v457 = vand.u32 %v456, 4294901760
    %v458 = vsub.f32 %v456, %v457
    %v459 = vand.u32 %v458, 4294901760
    %460 = vmatmul.mubr.f32.gmra.mxu0 %v459
    %v461 = vpop.f32.mrf.mxu0
    %v462 = vadd.f32 0.0, %v461
    %v463 = vpop.f32.mrf.mxu0
    %464 = vmatprep.mubr.f32.mxu0 0.0
    %v465 = vand.u32 %v289, 4294901760
    %v466 = vsub.f32 %v289, %v465
    %v467 = vand.u32 %v466, 4294901760
    %v468 = vsub.f32 %v466, %v467
    %v469 = vand.u32 %v468, 4294901760
    %470 = vmatmul.mubr.f32.gmra.mxu0 %v469
    %v471 = vpop.f32.mrf.mxu0
    %v472 = vadd.f32 0.0, %v471
    %v473 = vpop.f32.mrf.mxu0
    %474 = vmatprep.mubr.f32.mxu0 0.0
    %v475 = vand.u32 %v292, 4294901760
    %v476 = vsub.f32 %v292, %v475
    %v477 = vand.u32 %v476, 4294901760
    %v478 = vsub.f32 %v476, %v477
    %v479 = vand.u32 %v478, 4294901760
    %480 = vmatmul.mubr.f32.gmra.mxu0 %v479
    %v481 = vpop.f32.mrf.mxu0
    %v482 = vadd.f32 0.0, %v481
    %v483 = vpop.f32.mrf.mxu0
    %484 = vmatprep.mubr.f32.mxu0 0.0
    %v485 = vand.u32 %v295, 4294901760
    %v486 = vsub.f32 %v295, %v485
    %v487 = vand.u32 %v486, 4294901760
    %v488 = vsub.f32 %v486, %v487
    %v489 = vand.u32 %v488, 4294901760
    %490 = vmatmul.mubr.f32.gmra.mxu0 %v489
    %v491 = vpop.f32.mrf.mxu0
    %v492 = vadd.f32 0.0, %v491
    %v493 = vpop.f32.mrf.mxu0
    %494 = vmatprep.mubr.f32.mxu0 0.0
    %v495 = vand.u32 %v298, 4294901760
    %v496 = vsub.f32 %v298, %v495
    %v497 = vand.u32 %v496, 4294901760
    %v498 = vsub.f32 %v496, %v497
    %v499 = vand.u32 %v498, 4294901760
    %500 = vmatmul.mubr.f32.gmra.mxu0 %v499
    %v501 = vpop.f32.mrf.mxu0
    %v502 = vadd.f32 0.0, %v501
    %v503 = vpop.f32.mrf.mxu0
    %504 = vmatprep.mubr.f32.mxu0 0.0
    %v505 = vand.u32 %v301, 4294901760
    %v506 = vsub.f32 %v301, %v505
    %v507 = vand.u32 %v506, 4294901760
    %v508 = vsub.f32 %v506, %v507
    %v509 = vand.u32 %v508, 4294901760
    %510 = vmatmul.mubr.f32.gmra.mxu0 %v509
    %v511 = vpop.f32.mrf.mxu0
    %v512 = vadd.f32 0.0, %v511
    %v513 = vpop.f32.mrf.mxu0
    %514 = vmatprep.mubr.f32.mxu0 0.0
    %v515 = vand.u32 %v304, 4294901760
    %v516 = vsub.f32 %v304, %v515
    %v517 = vand.u32 %v516, 4294901760
    %v518 = vsub.f32 %v516, %v517
    %v519 = vand.u32 %v518, 4294901760
    %520 = vmatmul.mubr.f32.gmra.mxu0 %v519
    %v521 = vpop.f32.mrf.mxu0
    %v522 = vadd.f32 0.0, %v521
    %v523 = vpop.f32.mrf.mxu0
    %524 = vmatprep.mubr.f32.mxu0 0.0
    %v525 = vand.u32 %v307, 4294901760
    %v526 = vsub.f32 %v307, %v525
    %v527 = vand.u32 %v526, 4294901760
    %v528 = vsub.f32 %v526, %v527
    %v529 = vand.u32 %v528, 4294901760
    %530 = vmatmul.mubr.f32.gmra.mxu0 %v529
    %v531 = vpop.f32.mrf.mxu0
    %v532 = vadd.f32 0.0, %v531
    %v533 = vpop.f32.mrf.mxu0
    %534 = vdwg.mxu0
    %535 = vmatprep.subr.mxu0 0.0
    %536 = vmatpush1.msra.mxu0 0.0
    %537 = vmatprep.subr.mxu0 0.0
    %538 = vmatpush1.msra.mxu0 0.0
    %539 = vmatprep.subr.mxu0 0.0
    %540 = vmatpush1.msra.mxu0 0.0
    %541 = vmatprep.subr.mxu0 0.0
    %542 = vmatpush1.msra.mxu0 0.0
    %543 = vmatprep.subr.mxu0 0.0
    %544 = vmatpush1.msra.mxu0 0.0
    %545 = vmatprep.subr.mxu0 0.0
    %546 = vmatpush1.msra.mxu0 0.0
    %547 = vmatprep.subr.mxu0 0.0
    %548 = vmatpush1.msra.mxu0 0.0
    %549 = vmatprep.subr.mxu0 0.0
    %550 = vmatpush1.msra.mxu0 0.0
    %551 = vmatprep.subr.mxu0 0.0
    %552 = vmatpush1.msra.mxu0 0.0
    %553 = vmatprep.subr.mxu0 0.0
    %554 = vmatpush1.msra.mxu0 0.0
    %555 = vmatprep.subr.mxu0 0.0
    %556 = vmatpush1.msra.mxu0 0.0
    %557 = vmatprep.subr.mxu0 0.0
    %558 = vmatpush1.msra.mxu0 0.0
    %559 = vmatprep.subr.mxu0 0.0
    %560 = vmatpush1.msra.mxu0 0.0
    %561 = vmatprep.subr.mxu0 0.0
    %562 = vmatpush1.msra.mxu0 0.0
    %563 = vmatprep.subr.mxu0 0.0
    %564 = vmatpush1.msra.mxu0 0.0
    %565 = vmatprep.subr.mxu0 0.0
    %v566 = vand.u32 %v259, 4294901760
    %v567 = vsub.f32 %v259, %v566
    %v568 = vand.u32 %v567, 4294901760
    %v569 = vsub.f32 %v567, %v568
    %v570 = vand.u32 %v569, 4294901760
    %571 = vmatpush1.msra.mxu0 %v570
    %572 = vmatprep.subr.mxu0 0.0
    %573 = vmatpush2.msra.mxu0 0.0
    %574 = vmatprep.subr.mxu0 0.0
    %575 = vmatpush2.msra.mxu0 0.0
    %576 = vmatprep.subr.mxu0 0.0
    %577 = vmatpush2.msra.mxu0 0.0
    %578 = vmatprep.subr.mxu0 0.0
    %579 = vmatpush2.msra.mxu0 0.0
    %580 = vmatprep.subr.mxu0 0.0
    %581 = vmatpush2.msra.mxu0 0.0
    %582 = vmatprep.subr.mxu0 0.0
    %583 = vmatpush2.msra.mxu0 0.0
    %584 = vmatprep.subr.mxu0 0.0
    %585 = vmatpush2.msra.mxu0 0.0
    %586 = vmatprep.subr.mxu0 0.0
    %587 = vmatpush2.msra.mxu0 0.0
    %588 = vmatprep.subr.mxu0 0.0
    %589 = vmatpush2.msra.mxu0 0.0
    %590 = vmatprep.subr.mxu0 0.0
    %591 = vmatpush2.msra.mxu0 0.0
    %592 = vmatprep.subr.mxu0 0.0
    %593 = vmatpush2.msra.mxu0 0.0
    %594 = vmatprep.subr.mxu0 0.0
    %595 = vmatpush2.msra.mxu0 0.0
    %596 = vmatprep.subr.mxu0 0.0
    %597 = vmatpush2.msra.mxu0 0.0
    %598 = vmatprep.subr.mxu0 0.0
    %599 = vmatpush2.msra.mxu0 0.0
    %600 = vmatprep.subr.mxu0 0.0
    %601 = vmatpush2.msra.mxu0 0.0
    %602 = vmatprep.subr.mxu0 0.0
    %603 = vmatpush2.msra.mxu0 0.0
    %604 = vmatprep.mubr.f32.mxu0 0.0
    %v605 = vand.u32 %v262, 4294901760
    %606 = vmatmul.mubr.f32.gmra.mxu0 %v605
    %v607 = vpop.f32.mrf.mxu0
    %v608 = vadd.f32 %v382, %v607
    %v609 = vpop.f32.mrf.mxu0
    %610 = vmatprep.mubr.f32.mxu0 0.0
    %v611 = vand.u32 %v265, 4294901760
    %612 = vmatmul.mubr.f32.gmra.mxu0 %v611
    %v613 = vpop.f32.mrf.mxu0
    %v614 = vadd.f32 %v392, %v613
    %v615 = vpop.f32.mrf.mxu0
    %616 = vmatprep.mubr.f32.mxu0 0.0
    %v617 = vand.u32 %v268, 4294901760
    %618 = vmatmul.mubr.f32.gmra.mxu0 %v617
    %v619 = vpop.f32.mrf.mxu0
    %v620 = vadd.f32 %v402, %v619
    %v621 = vpop.f32.mrf.mxu0
    %622 = vmatprep.mubr.f32.mxu0 0.0
    %v623 = vand.u32 %v271, 4294901760
    %624 = vmatmul.mubr.f32.gmra.mxu0 %v623
    %v625 = vpop.f32.mrf.mxu0
    %v626 = vadd.f32 %v412, %v625
    %v627 = vpop.f32.mrf.mxu0
    %628 = vmatprep.mubr.f32.mxu0 0.0
    %v629 = vand.u32 %v274, 4294901760
    %630 = vmatmul.mubr.f32.gmra.mxu0 %v629
    %v631 = vpop.f32.mrf.mxu0
    %v632 = vadd.f32 %v422, %v631
    %v633 = vpop.f32.mrf.mxu0
    %634 = vmatprep.mubr.f32.mxu0 0.0
    %v635 = vand.u32 %v277, 4294901760
    %636 = vmatmul.mubr.f32.gmra.mxu0 %v635
    %v637 = vpop.f32.mrf.mxu0
    %v638 = vadd.f32 %v432, %v637
    %v639 = vpop.f32.mrf.mxu0
    %640 = vmatprep.mubr.f32.mxu0 0.0
    %v641 = vand.u32 %v280, 4294901760
    %642 = vmatmul.mubr.f32.gmra.mxu0 %v641
    %v643 = vpop.f32.mrf.mxu0
    %v644 = vadd.f32 %v442, %v643
    %v645 = vpop.f32.mrf.mxu0
    %646 = vmatprep.mubr.f32.mxu0 0.0
    %v647 = vand.u32 %v283, 4294901760
    %648 = vmatmul.mubr.f32.gmra.mxu0 %v647
    %v649 = vpop.f32.mrf.mxu0
    %v650 = vadd.f32 %v452, %v649
    %v651 = vpop.f32.mrf.mxu0
    %652 = vmatprep.mubr.f32.mxu0 0.0
    %v653 = vand.u32 %v286, 4294901760
    %654 = vmatmul.mubr.f32.gmra.mxu0 %v653
    %v655 = vpop.f32.mrf.mxu0
    %v656 = vadd.f32 %v462, %v655
    %v657 = vpop.f32.mrf.mxu0
    %658 = vmatprep.mubr.f32.mxu0 0.0
    %v659 = vand.u32 %v289, 4294901760
    %660 = vmatmul.mubr.f32.gmra.mxu0 %v659
    %v661 = vpop.f32.mrf.mxu0
    %v662 = vadd.f32 %v472, %v661
    %v663 = vpop.f32.mrf.mxu0
    %664 = vmatprep.mubr.f32.mxu0 0.0
    %v665 = vand.u32 %v292, 4294901760
    %666 = vmatmul.mubr.f32.gmra.mxu0 %v665
    %v667 = vpop.f32.mrf.mxu0
    %v668 = vadd.f32 %v482, %v667
    %v669 = vpop.f32.mrf.mxu0
    %670 = vmatprep.mubr.f32.mxu0 0.0
    %v671 = vand.u32 %v295, 4294901760
    %672 = vmatmul.mubr.f32.gmra.mxu0 %v671
    %v673 = vpop.f32.mrf.mxu0
    %v674 = vadd.f32 %v492, %v673
    %v675 = vpop.f32.mrf.mxu0
    %676 = vmatprep.mubr.f32.mxu0 0.0
    %v677 = vand.u32 %v298, 4294901760
    %678 = vmatmul.mubr.f32.gmra.mxu0 %v677
    %v679 = vpop.f32.mrf.mxu0
    %v680 = vadd.f32 %v502, %v679
    %v681 = vpop.f32.mrf.mxu0
    %682 = vmatprep.mubr.f32.mxu0 0.0
    %v683 = vand.u32 %v301, 4294901760
    %684 = vmatmul.mubr.f32.gmra.mxu0 %v683
    %v685 = vpop.f32.mrf.mxu0
    %v686 = vadd.f32 %v512, %v685
    %v687 = vpop.f32.mrf.mxu0
    %688 = vmatprep.mubr.f32.mxu0 0.0
    %v689 = vand.u32 %v304, 4294901760
    %690 = vmatmul.mubr.f32.gmra.mxu0 %v689
    %v691 = vpop.f32.mrf.mxu0
    %v692 = vadd.f32 %v522, %v691
    %v693 = vpop.f32.mrf.mxu0
    %694 = vmatprep.mubr.f32.mxu0 0.0
    %v695 = vand.u32 %v307, 4294901760
    %696 = vmatmul.mubr.f32.gmra.mxu0 %v695
    %v697 = vpop.f32.mrf.mxu0
    %v698 = vadd.f32 %v532, %v697
    %v699 = vpop.f32.mrf.mxu0
    %700 = vdwg.mxu0
    %701 = vmatprep.subr.mxu0 0.0
    %702 = vmatpush1.msra.mxu0 0.0
    %703 = vmatprep.subr.mxu0 0.0
    %704 = vmatpush1.msra.mxu0 0.0
    %705 = vmatprep.subr.mxu0 0.0
    %706 = vmatpush1.msra.mxu0 0.0
    %707 = vmatprep.subr.mxu0 0.0
    %708 = vmatpush1.msra.mxu0 0.0
    %709 = vmatprep.subr.mxu0 0.0
    %710 = vmatpush1.msra.mxu0 0.0
    %711 = vmatprep.subr.mxu0 0.0
    %712 = vmatpush1.msra.mxu0 0.0
    %713 = vmatprep.subr.mxu0 0.0
    %714 = vmatpush1.msra.mxu0 0.0
    %715 = vmatprep.subr.mxu0 0.0
    %716 = vmatpush1.msra.mxu0 0.0
    %717 = vmatprep.subr.mxu0 0.0
    %718 = vmatpush1.msra.mxu0 0.0
    %719 = vmatprep.subr.mxu0 0.0
    %720 = vmatpush1.msra.mxu0 0.0
    %721 = vmatprep.subr.mxu0 0.0
    %722 = vmatpush1.msra.mxu0 0.0
    %723 = vmatprep.subr.mxu0 0.0
    %724 = vmatpush1.msra.mxu0 0.0
    %725 = vmatprep.subr.mxu0 0.0
    %726 = vmatpush1.msra.mxu0 0.0
    %727 = vmatprep.subr.mxu0 0.0
    %728 = vmatpush1.msra.mxu0 0.0
    %729 = vmatprep.subr.mxu0 0.0
    %730 = vmatpush1.msra.mxu0 0.0
    %731 = vmatprep.subr.mxu0 0.0
    %v732 = vand.u32 %v259, 4294901760
    %v733 = vsub.f32 %v259, %v732
    %734 = vmatpush1.msra.mxu0 %v733
    %735 = vmatprep.subr.mxu0 0.0
    %736 = vmatpush2.msra.mxu0 0.0
    %737 = vmatprep.subr.mxu0 0.0
    %738 = vmatpush2.msra.mxu0 0.0
    %739 = vmatprep.subr.mxu0 0.0
    %740 = vmatpush2.msra.mxu0 0.0
    %741 = vmatprep.subr.mxu0 0.0
    %742 = vmatpush2.msra.mxu0 0.0
    %743 = vmatprep.subr.mxu0 0.0
    %744 = vmatpush2.msra.mxu0 0.0
    %745 = vmatprep.subr.mxu0 0.0
    %746 = vmatpush2.msra.mxu0 0.0
    %747 = vmatprep.subr.mxu0 0.0
    %748 = vmatpush2.msra.mxu0 0.0
    %749 = vmatprep.subr.mxu0 0.0
    %750 = vmatpush2.msra.mxu0 0.0
    %751 = vmatprep.subr.mxu0 0.0
    %752 = vmatpush2.msra.mxu0 0.0
    %753 = vmatprep.subr.mxu0 0.0
    %754 = vmatpush2.msra.mxu0 0.0
    %755 = vmatprep.subr.mxu0 0.0
    %756 = vmatpush2.msra.mxu0 0.0
    %757 = vmatprep.subr.mxu0 0.0
    %758 = vmatpush2.msra.mxu0 0.0
    %759 = vmatprep.subr.mxu0 0.0
    %760 = vmatpush2.msra.mxu0 0.0
    %761 = vmatprep.subr.mxu0 0.0
    %762 = vmatpush2.msra.mxu0 0.0
    %763 = vmatprep.subr.mxu0 0.0
    %764 = vmatpush2.msra.mxu0 0.0
    %765 = vmatprep.subr.mxu0 0.0
    %766 = vmatpush2.msra.mxu0 0.0
    %767 = vmatprep.mubr.f32.mxu0 0.0
    %v768 = vand.u32 %v262, 4294901760
    %v769 = vsub.f32 %v262, %v768
    %770 = vmatmul.mubr.f32.gmra.mxu0 %v769
    %v771 = vpop.f32.mrf.mxu0
    %v772 = vadd.f32 %v608, %v771
    %v773 = vpop.f32.mrf.mxu0
    %774 = vmatprep.mubr.f32.mxu0 0.0
    %v775 = vand.u32 %v265, 4294901760
    %v776 = vsub.f32 %v265, %v775
    %777 = vmatmul.mubr.f32.gmra.mxu0 %v776
    %v778 = vpop.f32.mrf.mxu0
    %v779 = vadd.f32 %v614, %v778
    %v780 = vpop.f32.mrf.mxu0
    %781 = vmatprep.mubr.f32.mxu0 0.0
    %v782 = vand.u32 %v268, 4294901760
    %v783 = vsub.f32 %v268, %v782
    %784 = vmatmul.mubr.f32.gmra.mxu0 %v783
    %v785 = vpop.f32.mrf.mxu0
    %v786 = vadd.f32 %v620, %v785
    %v787 = vpop.f32.mrf.mxu0
    %788 = vmatprep.mubr.f32.mxu0 0.0
    %v789 = vand.u32 %v271, 4294901760
    %v790 = vsub.f32 %v271, %v789
    %791 = vmatmul.mubr.f32.gmra.mxu0 %v790
    %v792 = vpop.f32.mrf.mxu0
    %v793 = vadd.f32 %v626, %v792
    %v794 = vpop.f32.mrf.mxu0
    %795 = vmatprep.mubr.f32.mxu0 0.0
    %v796 = vand.u32 %v274, 4294901760
    %v797 = vsub.f32 %v274, %v796
    %798 = vmatmul.mubr.f32.gmra.mxu0 %v797
    %v799 = vpop.f32.mrf.mxu0
    %v800 = vadd.f32 %v632, %v799
    %v801 = vpop.f32.mrf.mxu0
    %802 = vmatprep.mubr.f32.mxu0 0.0
    %v803 = vand.u32 %v277, 4294901760
    %v804 = vsub.f32 %v277, %v803
    %805 = vmatmul.mubr.f32.gmra.mxu0 %v804
    %v806 = vpop.f32.mrf.mxu0
    %v807 = vadd.f32 %v638, %v806
    %v808 = vpop.f32.mrf.mxu0
    %809 = vmatprep.mubr.f32.mxu0 0.0
    %v810 = vand.u32 %v280, 4294901760
    %v811 = vsub.f32 %v280, %v810
    %812 = vmatmul.mubr.f32.gmra.mxu0 %v811
    %v813 = vpop.f32.mrf.mxu0
    %v814 = vadd.f32 %v644, %v813
    %v815 = vpop.f32.mrf.mxu0
    %816 = vmatprep.mubr.f32.mxu0 0.0
    %v817 = vand.u32 %v283, 4294901760
    %v818 = vsub.f32 %v283, %v817
    %819 = vmatmul.mubr.f32.gmra.mxu0 %v818
    %v820 = vpop.f32.mrf.mxu0
    %v821 = vadd.f32 %v650, %v820
    %v822 = vpop.f32.mrf.mxu0
    %823 = vmatprep.mubr.f32.mxu0 0.0
    %v824 = vand.u32 %v286, 4294901760
    %v825 = vsub.f32 %v286, %v824
    %826 = vmatmul.mubr.f32.gmra.mxu0 %v825
    %v827 = vpop.f32.mrf.mxu0
    %v828 = vadd.f32 %v656, %v827
    %v829 = vpop.f32.mrf.mxu0
    %830 = vmatprep.mubr.f32.mxu0 0.0
    %v831 = vand.u32 %v289, 4294901760
    %v832 = vsub.f32 %v289, %v831
    %833 = vmatmul.mubr.f32.gmra.mxu0 %v832
    %v834 = vpop.f32.mrf.mxu0
    %v835 = vadd.f32 %v662, %v834
    %v836 = vpop.f32.mrf.mxu0
    %837 = vmatprep.mubr.f32.mxu0 0.0
    %v838 = vand.u32 %v292, 4294901760
    %v839 = vsub.f32 %v292, %v838
    %840 = vmatmul.mubr.f32.gmra.mxu0 %v839
    %v841 = vpop.f32.mrf.mxu0
    %v842 = vadd.f32 %v668, %v841
    %v843 = vpop.f32.mrf.mxu0
    %844 = vmatprep.mubr.f32.mxu0 0.0
    %v845 = vand.u32 %v295, 4294901760
    %v846 = vsub.f32 %v295, %v845
    %847 = vmatmul.mubr.f32.gmra.mxu0 %v846
    %v848 = vpop.f32.mrf.mxu0
    %v849 = vadd.f32 %v674, %v848
    %v850 = vpop.f32.mrf.mxu0
    %851 = vmatprep.mubr.f32.mxu0 0.0
    %v852 = vand.u32 %v298, 4294901760
    %v853 = vsub.f32 %v298, %v852
    %854 = vmatmul.mubr.f32.gmra.mxu0 %v853
    %v855 = vpop.f32.mrf.mxu0
    %v856 = vadd.f32 %v680, %v855
    %v857 = vpop.f32.mrf.mxu0
    %858 = vmatprep.mubr.f32.mxu0 0.0
    %v859 = vand.u32 %v301, 4294901760
    %v860 = vsub.f32 %v301, %v859
    %861 = vmatmul.mubr.f32.gmra.mxu0 %v860
    %v862 = vpop.f32.mrf.mxu0
    %v863 = vadd.f32 %v686, %v862
    %v864 = vpop.f32.mrf.mxu0
    %865 = vmatprep.mubr.f32.mxu0 0.0
    %v866 = vand.u32 %v304, 4294901760
    %v867 = vsub.f32 %v304, %v866
    %868 = vmatmul.mubr.f32.gmra.mxu0 %v867
    %v869 = vpop.f32.mrf.mxu0
    %v870 = vadd.f32 %v692, %v869
    %v871 = vpop.f32.mrf.mxu0
    %872 = vmatprep.mubr.f32.mxu0 0.0
    %v873 = vand.u32 %v307, 4294901760
    %v874 = vsub.f32 %v307, %v873
    %875 = vmatmul.mubr.f32.gmra.mxu0 %v874
    %v876 = vpop.f32.mrf.mxu0
    %v877 = vadd.f32 %v698, %v876
    %v878 = vpop.f32.mrf.mxu0
    %879 = vdwg.mxu0
    %880 = vmatprep.subr.mxu0 0.0
    %881 = vmatpush1.msra.mxu0 0.0
    %882 = vmatprep.subr.mxu0 0.0
    %883 = vmatpush1.msra.mxu0 0.0
    %884 = vmatprep.subr.mxu0 0.0
    %885 = vmatpush1.msra.mxu0 0.0
    %886 = vmatprep.subr.mxu0 0.0
    %887 = vmatpush1.msra.mxu0 0.0
    %888 = vmatprep.subr.mxu0 0.0
    %889 = vmatpush1.msra.mxu0 0.0
    %890 = vmatprep.subr.mxu0 0.0
    %891 = vmatpush1.msra.mxu0 0.0
    %892 = vmatprep.subr.mxu0 0.0
    %893 = vmatpush1.msra.mxu0 0.0
    %894 = vmatprep.subr.mxu0 0.0
    %895 = vmatpush1.msra.mxu0 0.0
    %896 = vmatprep.subr.mxu0 0.0
    %897 = vmatpush1.msra.mxu0 0.0
    %898 = vmatprep.subr.mxu0 0.0
    %899 = vmatpush1.msra.mxu0 0.0
    %900 = vmatprep.subr.mxu0 0.0
    %901 = vmatpush1.msra.mxu0 0.0
    %902 = vmatprep.subr.mxu0 0.0
    %903 = vmatpush1.msra.mxu0 0.0
    %904 = vmatprep.subr.mxu0 0.0
    %905 = vmatpush1.msra.mxu0 0.0
    %906 = vmatprep.subr.mxu0 0.0
    %907 = vmatpush1.msra.mxu0 0.0
    %908 = vmatprep.subr.mxu0 0.0
    %909 = vmatpush1.msra.mxu0 0.0
    %910 = vmatprep.subr.mxu0 0.0
    %v911 = vand.u32 %v259, 4294901760
    %912 = vmatpush1.msra.mxu0 %v911
    %913 = vmatprep.subr.mxu0 0.0
    %914 = vmatpush2.msra.mxu0 0.0
    %915 = vmatprep.subr.mxu0 0.0
    %916 = vmatpush2.msra.mxu0 0.0
    %917 = vmatprep.subr.mxu0 0.0
    %918 = vmatpush2.msra.mxu0 0.0
    %919 = vmatprep.subr.mxu0 0.0
    %920 = vmatpush2.msra.mxu0 0.0
    %921 = vmatprep.subr.mxu0 0.0
    %922 = vmatpush2.msra.mxu0 0.0
    %923 = vmatprep.subr.mxu0 0.0
    %924 = vmatpush2.msra.mxu0 0.0
    %925 = vmatprep.subr.mxu0 0.0
    %926 = vmatpush2.msra.mxu0 0.0
    %927 = vmatprep.subr.mxu0 0.0
    %928 = vmatpush2.msra.mxu0 0.0
    %929 = vmatprep.subr.mxu0 0.0
    %930 = vmatpush2.msra.mxu0 0.0
    %931 = vmatprep.subr.mxu0 0.0
    %932 = vmatpush2.msra.mxu0 0.0
    %933 = vmatprep.subr.mxu0 0.0
    %934 = vmatpush2.msra.mxu0 0.0
    %935 = vmatprep.subr.mxu0 0.0
    %936 = vmatpush2.msra.mxu0 0.0
    %937 = vmatprep.subr.mxu0 0.0
    %938 = vmatpush2.msra.mxu0 0.0
    %939 = vmatprep.subr.mxu0 0.0
    %940 = vmatpush2.msra.mxu0 0.0
    %941 = vmatprep.subr.mxu0 0.0
    %942 = vmatpush2.msra.mxu0 0.0
    %943 = vmatprep.subr.mxu0 0.0
    %944 = vmatpush2.msra.mxu0 0.0
    %945 = vmatprep.mubr.f32.mxu0 0.0
    %v946 = vand.u32 %v262, 4294901760
    %v947 = vsub.f32 %v262, %v946
    %v948 = vand.u32 %v947, 4294901760
    %949 = vmatmul.mubr.f32.gmra.mxu0 %v948
    %v950 = vpop.f32.mrf.mxu0
    %v951 = vadd.f32 %v772, %v950
    %v952 = vpop.f32.mrf.mxu0
    %953 = vmatprep.mubr.f32.mxu0 0.0
    %v954 = vand.u32 %v265, 4294901760
    %v955 = vsub.f32 %v265, %v954
    %v956 = vand.u32 %v955, 4294901760
    %957 = vmatmul.mubr.f32.gmra.mxu0 %v956
    %v958 = vpop.f32.mrf.mxu0
    %v959 = vadd.f32 %v779, %v958
    %v960 = vpop.f32.mrf.mxu0
    %961 = vmatprep.mubr.f32.mxu0 0.0
    %v962 = vand.u32 %v268, 4294901760
    %v963 = vsub.f32 %v268, %v962
    %v964 = vand.u32 %v963, 4294901760
    %965 = vmatmul.mubr.f32.gmra.mxu0 %v964
    %v966 = vpop.f32.mrf.mxu0
    %v967 = vadd.f32 %v786, %v966
    %v968 = vpop.f32.mrf.mxu0
    %969 = vmatprep.mubr.f32.mxu0 0.0
    %v970 = vand.u32 %v271, 4294901760
    %v971 = vsub.f32 %v271, %v970
    %v972 = vand.u32 %v971, 4294901760
    %973 = vmatmul.mubr.f32.gmra.mxu0 %v972
    %v974 = vpop.f32.mrf.mxu0
    %v975 = vadd.f32 %v793, %v974
    %v976 = vpop.f32.mrf.mxu0
    %977 = vmatprep.mubr.f32.mxu0 0.0
    %v978 = vand.u32 %v274, 4294901760
    %v979 = vsub.f32 %v274, %v978
    %v980 = vand.u32 %v979, 4294901760
    %981 = vmatmul.mubr.f32.gmra.mxu0 %v980
    %v982 = vpop.f32.mrf.mxu0
    %v983 = vadd.f32 %v800, %v982
    %v984 = vpop.f32.mrf.mxu0
    %985 = vmatprep.mubr.f32.mxu0 0.0
    %v986 = vand.u32 %v277, 4294901760
    %v987 = vsub.f32 %v277, %v986
    %v988 = vand.u32 %v987, 4294901760
    %989 = vmatmul.mubr.f32.gmra.mxu0 %v988
    %v990 = vpop.f32.mrf.mxu0
    %v991 = vadd.f32 %v807, %v990
    %v992 = vpop.f32.mrf.mxu0
    %993 = vmatprep.mubr.f32.mxu0 0.0
    %v994 = vand.u32 %v280, 4294901760
    %v995 = vsub.f32 %v280, %v994
    %v996 = vand.u32 %v995, 4294901760
    %997 = vmatmul.mubr.f32.gmra.mxu0 %v996
    %v998 = vpop.f32.mrf.mxu0
    %v999 = vadd.f32 %v814, %v998
    %v1000 = vpop.f32.mrf.mxu0
    %1001 = vmatprep.mubr.f32.mxu0 0.0
    %v1002 = vand.u32 %v283, 4294901760
    %v1003 = vsub.f32 %v283, %v1002
    %v1004 = vand.u32 %v1003, 4294901760
    %1005 = vmatmul.mubr.f32.gmra.mxu0 %v1004
    %v1006 = vpop.f32.mrf.mxu0
    %v1007 = vadd.f32 %v821, %v1006
    %v1008 = vpop.f32.mrf.mxu0
    %1009 = vmatprep.mubr.f32.mxu0 0.0
    %v1010 = vand.u32 %v286, 4294901760
    %v1011 = vsub.f32 %v286, %v1010
    %v1012 = vand.u32 %v1011, 4294901760
    %1013 = vmatmul.mubr.f32.gmra.mxu0 %v1012
    %v1014 = vpop.f32.mrf.mxu0
    %v1015 = vadd.f32 %v828, %v1014
    %v1016 = vpop.f32.mrf.mxu0
    %1017 = vmatprep.mubr.f32.mxu0 0.0
    %v1018 = vand.u32 %v289, 4294901760
    %v1019 = vsub.f32 %v289, %v1018
    %v1020 = vand.u32 %v1019, 4294901760
    %1021 = vmatmul.mubr.f32.gmra.mxu0 %v1020
    %v1022 = vpop.f32.mrf.mxu0
    %v1023 = vadd.f32 %v835, %v1022
    %v1024 = vpop.f32.mrf.mxu0
    %1025 = vmatprep.mubr.f32.mxu0 0.0
    %v1026 = vand.u32 %v292, 4294901760
    %v1027 = vsub.f32 %v292, %v1026
    %v1028 = vand.u32 %v1027, 4294901760
    %1029 = vmatmul.mubr.f32.gmra.mxu0 %v1028
    %v1030 = vpop.f32.mrf.mxu0
    %v1031 = vadd.f32 %v842, %v1030
    %v1032 = vpop.f32.mrf.mxu0
    %1033 = vmatprep.mubr.f32.mxu0 0.0
    %v1034 = vand.u32 %v295, 4294901760
    %v1035 = vsub.f32 %v295, %v1034
    %v1036 = vand.u32 %v1035, 4294901760
    %1037 = vmatmul.mubr.f32.gmra.mxu0 %v1036
    %v1038 = vpop.f32.mrf.mxu0
    %v1039 = vadd.f32 %v849, %v1038
    %v1040 = vpop.f32.mrf.mxu0
    %1041 = vmatprep.mubr.f32.mxu0 0.0
    %v1042 = vand.u32 %v298, 4294901760
    %v1043 = vsub.f32 %v298, %v1042
    %v1044 = vand.u32 %v1043, 4294901760
    %1045 = vmatmul.mubr.f32.gmra.mxu0 %v1044
    %v1046 = vpop.f32.mrf.mxu0
    %v1047 = vadd.f32 %v856, %v1046
    %v1048 = vpop.f32.mrf.mxu0
    %1049 = vmatprep.mubr.f32.mxu0 0.0
    %v1050 = vand.u32 %v301, 4294901760
    %v1051 = vsub.f32 %v301, %v1050
    %v1052 = vand.u32 %v1051, 4294901760
    %1053 = vmatmul.mubr.f32.gmra.mxu0 %v1052
    %v1054 = vpop.f32.mrf.mxu0
    %v1055 = vadd.f32 %v863, %v1054
    %v1056 = vpop.f32.mrf.mxu0
    %1057 = vmatprep.mubr.f32.mxu0 0.0
    %v1058 = vand.u32 %v304, 4294901760
    %v1059 = vsub.f32 %v304, %v1058
    %v1060 = vand.u32 %v1059, 4294901760
    %1061 = vmatmul.mubr.f32.gmra.mxu0 %v1060
    %v1062 = vpop.f32.mrf.mxu0
    %v1063 = vadd.f32 %v870, %v1062
    %v1064 = vpop.f32.mrf.mxu0
    %1065 = vmatprep.mubr.f32.mxu0 0.0
    %v1066 = vand.u32 %v307, 4294901760
    %v1067 = vsub.f32 %v307, %v1066
    %v1068 = vand.u32 %v1067, 4294901760
    %1069 = vmatmul.mubr.f32.gmra.mxu0 %v1068
    %v1070 = vpop.f32.mrf.mxu0
    %v1071 = vadd.f32 %v877, %v1070
    %v1072 = vpop.f32.mrf.mxu0
    %1073 = vdwg.mxu0
    %1074 = vmatprep.subr.mxu0 0.0
    %1075 = vmatpush1.msra.mxu0 0.0
    %1076 = vmatprep.subr.mxu0 0.0
    %1077 = vmatpush1.msra.mxu0 0.0
    %1078 = vmatprep.subr.mxu0 0.0
    %1079 = vmatpush1.msra.mxu0 0.0
    %1080 = vmatprep.subr.mxu0 0.0
    %1081 = vmatpush1.msra.mxu0 0.0
    %1082 = vmatprep.subr.mxu0 0.0
    %1083 = vmatpush1.msra.mxu0 0.0
    %1084 = vmatprep.subr.mxu0 0.0
    %1085 = vmatpush1.msra.mxu0 0.0
    %1086 = vmatprep.subr.mxu0 0.0
    %1087 = vmatpush1.msra.mxu0 0.0
    %1088 = vmatprep.subr.mxu0 0.0
    %1089 = vmatpush1.msra.mxu0 0.0
    %1090 = vmatprep.subr.mxu0 0.0
    %1091 = vmatpush1.msra.mxu0 0.0
    %1092 = vmatprep.subr.mxu0 0.0
    %1093 = vmatpush1.msra.mxu0 0.0
    %1094 = vmatprep.subr.mxu0 0.0
    %1095 = vmatpush1.msra.mxu0 0.0
    %1096 = vmatprep.subr.mxu0 0.0
    %1097 = vmatpush1.msra.mxu0 0.0
    %1098 = vmatprep.subr.mxu0 0.0
    %1099 = vmatpush1.msra.mxu0 0.0
    %1100 = vmatprep.subr.mxu0 0.0
    %1101 = vmatpush1.msra.mxu0 0.0
    %1102 = vmatprep.subr.mxu0 0.0
    %1103 = vmatpush1.msra.mxu0 0.0
    %1104 = vmatprep.subr.mxu0 0.0
    %v1105 = vand.u32 %v259, 4294901760
    %v1106 = vsub.f32 %v259, %v1105
    %v1107 = vand.u32 %v1106, 4294901760
    %1108 = vmatpush1.msra.mxu0 %v1107
    %1109 = vmatprep.subr.mxu0 0.0
    %1110 = vmatpush2.msra.mxu0 0.0
    %1111 = vmatprep.subr.mxu0 0.0
    %1112 = vmatpush2.msra.mxu0 0.0
    %1113 = vmatprep.subr.mxu0 0.0
    %1114 = vmatpush2.msra.mxu0 0.0
    %1115 = vmatprep.subr.mxu0 0.0
    %1116 = vmatpush2.msra.mxu0 0.0
    %1117 = vmatprep.subr.mxu0 0.0
    %1118 = vmatpush2.msra.mxu0 0.0
    %1119 = vmatprep.subr.mxu0 0.0
    %1120 = vmatpush2.msra.mxu0 0.0
    %1121 = vmatprep.subr.mxu0 0.0
    %1122 = vmatpush2.msra.mxu0 0.0
    %1123 = vmatprep.subr.mxu0 0.0
    %1124 = vmatpush2.msra.mxu0 0.0
    %1125 = vmatprep.subr.mxu0 0.0
    %1126 = vmatpush2.msra.mxu0 0.0
    %1127 = vmatprep.subr.mxu0 0.0
    %1128 = vmatpush2.msra.mxu0 0.0
    %1129 = vmatprep.subr.mxu0 0.0
    %1130 = vmatpush2.msra.mxu0 0.0
    %1131 = vmatprep.subr.mxu0 0.0
    %1132 = vmatpush2.msra.mxu0 0.0
    %1133 = vmatprep.subr.mxu0 0.0
    %1134 = vmatpush2.msra.mxu0 0.0
    %1135 = vmatprep.subr.mxu0 0.0
    %1136 = vmatpush2.msra.mxu0 0.0
    %1137 = vmatprep.subr.mxu0 0.0
    %1138 = vmatpush2.msra.mxu0 0.0
    %1139 = vmatprep.subr.mxu0 0.0
    %1140 = vmatpush2.msra.mxu0 0.0
    %1141 = vmatprep.mubr.f32.mxu0 0.0
    %v1142 = vand.u32 %v262, 4294901760
    %1143 = vmatmul.mubr.f32.gmra.mxu0 %v1142
    %v1144 = vpop.f32.mrf.mxu0
    %v1145 = vadd.f32 %v951, %v1144
    %v1146 = vpop.f32.mrf.mxu0
    %1147 = vmatprep.mubr.f32.mxu0 0.0
    %v1148 = vand.u32 %v265, 4294901760
    %1149 = vmatmul.mubr.f32.gmra.mxu0 %v1148
    %v1150 = vpop.f32.mrf.mxu0
    %v1151 = vadd.f32 %v959, %v1150
    %v1152 = vpop.f32.mrf.mxu0
    %1153 = vmatprep.mubr.f32.mxu0 0.0
    %v1154 = vand.u32 %v268, 4294901760
    %1155 = vmatmul.mubr.f32.gmra.mxu0 %v1154
    %v1156 = vpop.f32.mrf.mxu0
    %v1157 = vadd.f32 %v967, %v1156
    %v1158 = vpop.f32.mrf.mxu0
    %1159 = vmatprep.mubr.f32.mxu0 0.0
    %v1160 = vand.u32 %v271, 4294901760
    %1161 = vmatmul.mubr.f32.gmra.mxu0 %v1160
    %v1162 = vpop.f32.mrf.mxu0
    %v1163 = vadd.f32 %v975, %v1162
    %v1164 = vpop.f32.mrf.mxu0
    %1165 = vmatprep.mubr.f32.mxu0 0.0
    %v1166 = vand.u32 %v274, 4294901760
    %1167 = vmatmul.mubr.f32.gmra.mxu0 %v1166
    %v1168 = vpop.f32.mrf.mxu0
    %v1169 = vadd.f32 %v983, %v1168
    %v1170 = vpop.f32.mrf.mxu0
    %1171 = vmatprep.mubr.f32.mxu0 0.0
    %v1172 = vand.u32 %v277, 4294901760
    %1173 = vmatmul.mubr.f32.gmra.mxu0 %v1172
    %v1174 = vpop.f32.mrf.mxu0
    %v1175 = vadd.f32 %v991, %v1174
    %v1176 = vpop.f32.mrf.mxu0
    %1177 = vmatprep.mubr.f32.mxu0 0.0
    %v1178 = vand.u32 %v280, 4294901760
    %1179 = vmatmul.mubr.f32.gmra.mxu0 %v1178
    %v1180 = vpop.f32.mrf.mxu0
    %v1181 = vadd.f32 %v999, %v1180
    %v1182 = vpop.f32.mrf.mxu0
    %1183 = vmatprep.mubr.f32.mxu0 0.0
    %v1184 = vand.u32 %v283, 4294901760
    %1185 = vmatmul.mubr.f32.gmra.mxu0 %v1184
    %v1186 = vpop.f32.mrf.mxu0
    %v1187 = vadd.f32 %v1007, %v1186
    %v1188 = vpop.f32.mrf.mxu0
    %1189 = vmatprep.mubr.f32.mxu0 0.0
    %v1190 = vand.u32 %v286, 4294901760
    %1191 = vmatmul.mubr.f32.gmra.mxu0 %v1190
    %v1192 = vpop.f32.mrf.mxu0
    %v1193 = vadd.f32 %v1015, %v1192
    %v1194 = vpop.f32.mrf.mxu0
    %1195 = vmatprep.mubr.f32.mxu0 0.0
    %v1196 = vand.u32 %v289, 4294901760
    %1197 = vmatmul.mubr.f32.gmra.mxu0 %v1196
    %v1198 = vpop.f32.mrf.mxu0
    %v1199 = vadd.f32 %v1023, %v1198
    %v1200 = vpop.f32.mrf.mxu0
    %1201 = vmatprep.mubr.f32.mxu0 0.0
    %v1202 = vand.u32 %v292, 4294901760
    %1203 = vmatmul.mubr.f32.gmra.mxu0 %v1202
    %v1204 = vpop.f32.mrf.mxu0
    %v1205 = vadd.f32 %v1031, %v1204
    %v1206 = vpop.f32.mrf.mxu0
    %1207 = vmatprep.mubr.f32.mxu0 0.0
    %v1208 = vand.u32 %v295, 4294901760
    %1209 = vmatmul.mubr.f32.gmra.mxu0 %v1208
    %v1210 = vpop.f32.mrf.mxu0
    %v1211 = vadd.f32 %v1039, %v1210
    %v1212 = vpop.f32.mrf.mxu0
    %1213 = vmatprep.mubr.f32.mxu0 0.0
    %v1214 = vand.u32 %v298, 4294901760
    %1215 = vmatmul.mubr.f32.gmra.mxu0 %v1214
    %v1216 = vpop.f32.mrf.mxu0
    %v1217 = vadd.f32 %v1047, %v1216
    %v1218 = vpop.f32.mrf.mxu0
    %1219 = vmatprep.mubr.f32.mxu0 0.0
    %v1220 = vand.u32 %v301, 4294901760
    %1221 = vmatmul.mubr.f32.gmra.mxu0 %v1220
    %v1222 = vpop.f32.mrf.mxu0
    %v1223 = vadd.f32 %v1055, %v1222
    %v1224 = vpop.f32.mrf.mxu0
    %1225 = vmatprep.mubr.f32.mxu0 0.0
    %v1226 = vand.u32 %v304, 4294901760
    %1227 = vmatmul.mubr.f32.gmra.mxu0 %v1226
    %v1228 = vpop.f32.mrf.mxu0
    %v1229 = vadd.f32 %v1063, %v1228
    %v1230 = vpop.f32.mrf.mxu0
    %1231 = vmatprep.mubr.f32.mxu0 0.0
    %v1232 = vand.u32 %v307, 4294901760
    %1233 = vmatmul.mubr.f32.gmra.mxu0 %v1232
    %v1234 = vpop.f32.mrf.mxu0
    %v1235 = vadd.f32 %v1071, %v1234
    %v1236 = vpop.f32.mrf.mxu0
    %1237 = vdwg.mxu0
    %1238 = vmatprep.subr.mxu0 0.0
    %1239 = vmatpush1.msra.mxu0 0.0
    %1240 = vmatprep.subr.mxu0 0.0
    %1241 = vmatpush1.msra.mxu0 0.0
    %1242 = vmatprep.subr.mxu0 0.0
    %1243 = vmatpush1.msra.mxu0 0.0
    %1244 = vmatprep.subr.mxu0 0.0
    %1245 = vmatpush1.msra.mxu0 0.0
    %1246 = vmatprep.subr.mxu0 0.0
    %1247 = vmatpush1.msra.mxu0 0.0
    %1248 = vmatprep.subr.mxu0 0.0
    %1249 = vmatpush1.msra.mxu0 0.0
    %1250 = vmatprep.subr.mxu0 0.0
    %1251 = vmatpush1.msra.mxu0 0.0
    %1252 = vmatprep.subr.mxu0 0.0
    %1253 = vmatpush1.msra.mxu0 0.0
    %1254 = vmatprep.subr.mxu0 0.0
    %1255 = vmatpush1.msra.mxu0 0.0
    %1256 = vmatprep.subr.mxu0 0.0
    %1257 = vmatpush1.msra.mxu0 0.0
    %1258 = vmatprep.subr.mxu0 0.0
    %1259 = vmatpush1.msra.mxu0 0.0
    %1260 = vmatprep.subr.mxu0 0.0
    %1261 = vmatpush1.msra.mxu0 0.0
    %1262 = vmatprep.subr.mxu0 0.0
    %1263 = vmatpush1.msra.mxu0 0.0
    %1264 = vmatprep.subr.mxu0 0.0
    %1265 = vmatpush1.msra.mxu0 0.0
    %1266 = vmatprep.subr.mxu0 0.0
    %1267 = vmatpush1.msra.mxu0 0.0
    %1268 = vmatprep.subr.mxu0 0.0
    %v1269 = vand.u32 %v259, 4294901760
    %1270 = vmatpush1.msra.mxu0 %v1269
    %1271 = vmatprep.subr.mxu0 0.0
    %1272 = vmatpush2.msra.mxu0 0.0
    %1273 = vmatprep.subr.mxu0 0.0
    %1274 = vmatpush2.msra.mxu0 0.0
    %1275 = vmatprep.subr.mxu0 0.0
    %1276 = vmatpush2.msra.mxu0 0.0
    %1277 = vmatprep.subr.mxu0 0.0
    %1278 = vmatpush2.msra.mxu0 0.0
    %1279 = vmatprep.subr.mxu0 0.0
    %1280 = vmatpush2.msra.mxu0 0.0
    %1281 = vmatprep.subr.mxu0 0.0
    %1282 = vmatpush2.msra.mxu0 0.0
    %1283 = vmatprep.subr.mxu0 0.0
    %1284 = vmatpush2.msra.mxu0 0.0
    %1285 = vmatprep.subr.mxu0 0.0
    %1286 = vmatpush2.msra.mxu0 0.0
    %1287 = vmatprep.subr.mxu0 0.0
    %1288 = vmatpush2.msra.mxu0 0.0
    %1289 = vmatprep.subr.mxu0 0.0
    %1290 = vmatpush2.msra.mxu0 0.0
    %1291 = vmatprep.subr.mxu0 0.0
    %1292 = vmatpush2.msra.mxu0 0.0
    %1293 = vmatprep.subr.mxu0 0.0
    %1294 = vmatpush2.msra.mxu0 0.0
    %1295 = vmatprep.subr.mxu0 0.0
    %1296 = vmatpush2.msra.mxu0 0.0
    %1297 = vmatprep.subr.mxu0 0.0
    %1298 = vmatpush2.msra.mxu0 0.0
    %1299 = vmatprep.subr.mxu0 0.0
    %1300 = vmatpush2.msra.mxu0 0.0
    %1301 = vmatprep.subr.mxu0 0.0
    %1302 = vmatpush2.msra.mxu0 0.0
    %1303 = vmatprep.mubr.f32.mxu0 0.0
    %v1304 = vand.u32 %v262, 4294901760
    %1305 = vmatmul.mubr.f32.gmra.mxu0 %v1304
    %v1306 = vpop.f32.mrf.mxu0
    %v1307 = vadd.f32 %v1145, %v1306
    %v1308 = vpop.f32.mrf.mxu0
    %1309 = vmatprep.mubr.f32.mxu0 0.0
    %v1310 = vand.u32 %v265, 4294901760
    %1311 = vmatmul.mubr.f32.gmra.mxu0 %v1310
    %v1312 = vpop.f32.mrf.mxu0
    %v1313 = vadd.f32 %v1151, %v1312
    %v1314 = vpop.f32.mrf.mxu0
    %1315 = vmatprep.mubr.f32.mxu0 0.0
    %v1316 = vand.u32 %v268, 4294901760
    %1317 = vmatmul.mubr.f32.gmra.mxu0 %v1316
    %v1318 = vpop.f32.mrf.mxu0
    %v1319 = vadd.f32 %v1157, %v1318
    %v1320 = vpop.f32.mrf.mxu0
    %1321 = vmatprep.mubr.f32.mxu0 0.0
    %v1322 = vand.u32 %v271, 4294901760
    %1323 = vmatmul.mubr.f32.gmra.mxu0 %v1322
    %v1324 = vpop.f32.mrf.mxu0
    %v1325 = vadd.f32 %v1163, %v1324
    %v1326 = vpop.f32.mrf.mxu0
    %1327 = vmatprep.mubr.f32.mxu0 0.0
    %v1328 = vand.u32 %v274, 4294901760
    %1329 = vmatmul.mubr.f32.gmra.mxu0 %v1328
    %v1330 = vpop.f32.mrf.mxu0
    %v1331 = vadd.f32 %v1169, %v1330
    %v1332 = vpop.f32.mrf.mxu0
    %1333 = vmatprep.mubr.f32.mxu0 0.0
    %v1334 = vand.u32 %v277, 4294901760
    %1335 = vmatmul.mubr.f32.gmra.mxu0 %v1334
    %v1336 = vpop.f32.mrf.mxu0
    %v1337 = vadd.f32 %v1175, %v1336
    %v1338 = vpop.f32.mrf.mxu0
    %1339 = vmatprep.mubr.f32.mxu0 0.0
    %v1340 = vand.u32 %v280, 4294901760
    %1341 = vmatmul.mubr.f32.gmra.mxu0 %v1340
    %v1342 = vpop.f32.mrf.mxu0
    %v1343 = vadd.f32 %v1181, %v1342
    %v1344 = vpop.f32.mrf.mxu0
    %1345 = vmatprep.mubr.f32.mxu0 0.0
    %v1346 = vand.u32 %v283, 4294901760
    %1347 = vmatmul.mubr.f32.gmra.mxu0 %v1346
    %v1348 = vpop.f32.mrf.mxu0
    %v1349 = vadd.f32 %v1187, %v1348
    %v1350 = vpop.f32.mrf.mxu0
    %1351 = vmatprep.mubr.f32.mxu0 0.0
    %v1352 = vand.u32 %v286, 4294901760
    %1353 = vmatmul.mubr.f32.gmra.mxu0 %v1352
    %v1354 = vpop.f32.mrf.mxu0
    %v1355 = vadd.f32 %v1193, %v1354
    %v1356 = vpop.f32.mrf.mxu0
    %1357 = vmatprep.mubr.f32.mxu0 0.0
    %v1358 = vand.u32 %v289, 4294901760
    %1359 = vmatmul.mubr.f32.gmra.mxu0 %v1358
    %v1360 = vpop.f32.mrf.mxu0
    %v1361 = vadd.f32 %v1199, %v1360
    %v1362 = vpop.f32.mrf.mxu0
    %1363 = vmatprep.mubr.f32.mxu0 0.0
    %v1364 = vand.u32 %v292, 4294901760
    %1365 = vmatmul.mubr.f32.gmra.mxu0 %v1364
    %v1366 = vpop.f32.mrf.mxu0
    %v1367 = vadd.f32 %v1205, %v1366
    %v1368 = vpop.f32.mrf.mxu0
    %1369 = vmatprep.mubr.f32.mxu0 0.0
    %v1370 = vand.u32 %v295, 4294901760
    %1371 = vmatmul.mubr.f32.gmra.mxu0 %v1370
    %v1372 = vpop.f32.mrf.mxu0
    %v1373 = vadd.f32 %v1211, %v1372
    %v1374 = vpop.f32.mrf.mxu0
    %1375 = vmatprep.mubr.f32.mxu0 0.0
    %v1376 = vand.u32 %v298, 4294901760
    %1377 = vmatmul.mubr.f32.gmra.mxu0 %v1376
    %v1378 = vpop.f32.mrf.mxu0
    %v1379 = vadd.f32 %v1217, %v1378
    %v1380 = vpop.f32.mrf.mxu0
    %1381 = vmatprep.mubr.f32.mxu0 0.0
    %v1382 = vand.u32 %v301, 4294901760
    %1383 = vmatmul.mubr.f32.gmra.mxu0 %v1382
    %v1384 = vpop.f32.mrf.mxu0
    %v1385 = vadd.f32 %v1223, %v1384
    %v1386 = vpop.f32.mrf.mxu0
    %1387 = vmatprep.mubr.f32.mxu0 0.0
    %v1388 = vand.u32 %v304, 4294901760
    %1389 = vmatmul.mubr.f32.gmra.mxu0 %v1388
    %v1390 = vpop.f32.mrf.mxu0
    %v1391 = vadd.f32 %v1229, %v1390
    %v1392 = vpop.f32.mrf.mxu0
    %1393 = vmatprep.mubr.f32.mxu0 0.0
    %v1394 = vand.u32 %v307, 4294901760
    %1395 = vmatmul.mubr.f32.gmra.mxu0 %v1394
    %v1396 = vpop.f32.mrf.mxu0
    %v1397 = vadd.f32 %v1235, %v1396
    %v1398 = vpop.f32.mrf.mxu0
    %1399 = vdwg.mxu0
    %v1400 = vmul.f32 %v1307, 1.442695
    %v1401 = vpow.pop %v1400
    %v1402 = vmul.f32 %v1313, 1.442695
    %v1403 = vpow.pop %v1402
    %v1404 = vmul.f32 %v1319, 1.442695
    %v1405 = vpow.pop %v1404
    %v1406 = vmul.f32 %v1325, 1.442695
    %v1407 = vpow.pop %v1406
    %v1408 = vmul.f32 %v1331, 1.442695
    %v1409 = vpow.pop %v1408
    %v1410 = vmul.f32 %v1337, 1.442695
    %v1411 = vpow.pop %v1410
    %v1412 = vmul.f32 %v1343, 1.442695
    %v1413 = vpow.pop %v1412
    %v1414 = vmul.f32 %v1349, 1.442695
    %v1415 = vpow.pop %v1414
    %v1416 = vmul.f32 %v1355, 1.442695
    %v1417 = vpow.pop %v1416
    %v1418 = vmul.f32 %v1361, 1.442695
    %v1419 = vpow.pop %v1418
    %v1420 = vmul.f32 %v1367, 1.442695
    %v1421 = vpow.pop %v1420
    %v1422 = vmul.f32 %v1373, 1.442695
    %v1423 = vpow.pop %v1422
    %v1424 = vmul.f32 %v1379, 1.442695
    %v1425 = vpow.pop %v1424
    %v1426 = vmul.f32 %v1385, 1.442695
    %v1427 = vpow.pop %v1426
    %v1428 = vmul.f32 %v1391, 1.442695
    %v1429 = vpow.pop %v1428
    %v1430 = vmul.f32 %v1397, 1.442695
    %v1431 = vpow.pop %v1430
    %v1432 = vld [vmem:[%s4] sm:$0x1]
    %v1434 = vlaneseq
    %v1435 = vshrl.u32 %v1434, 7
    %v1436 = vsub.s32 0, %v1435
    %v1437 = vrot.slane %v1432, %v1436
    %v1439 = vmul.f32 %v1401, %v1437
    %v1440 = vmul.f32 %v1403, %v1437
    %v1441 = vmul.f32 %v1405, %v1437
    %v1442 = vmul.f32 %v1407, %v1437
    %v1443 = vmul.f32 %v1409, %v1437
    %v1444 = vmul.f32 %v1411, %v1437
    %v1445 = vmul.f32 %v1413, %v1437
    %v1446 = vmul.f32 %v1415, %v1437
    %v1447 = vmul.f32 %v1417, %v1437
    %v1448 = vmul.f32 %v1419, %v1437
    %v1449 = vmul.f32 %v1421, %v1437
    %v1450 = vmul.f32 %v1423, %v1437
    %v1451 = vmul.f32 %v1425, %v1437
    %v1452 = vmul.f32 %v1427, %v1437
    %v1453 = vmul.f32 %v1429, %v1437
    %v1454 = vmul.f32 %v1431, %v1437
    %1455 = vadd.xlane.f32.xlu0 %v1439
    %v1456 = vpop.xlane.xlu0 %1455
    %1457 = vadd.xlane.f32.xlu0 %v1440
    %v1458 = vpop.xlane.xlu0 %1457
    %1459 = vadd.xlane.f32.xlu0 %v1441
    %v1460 = vpop.xlane.xlu0 %1459
    %1461 = vadd.xlane.f32.xlu0 %v1442
    %v1462 = vpop.xlane.xlu0 %1461
    %1463 = vadd.xlane.f32.xlu0 %v1443
    %v1464 = vpop.xlane.xlu0 %1463
    %1465 = vadd.xlane.f32.xlu0 %v1444
    %v1466 = vpop.xlane.xlu0 %1465
    %1467 = vadd.xlane.f32.xlu0 %v1445
    %v1468 = vpop.xlane.xlu0 %1467
    %1469 = vadd.xlane.f32.xlu0 %v1446
    %v1470 = vpop.xlane.xlu0 %1469
    %1471 = vadd.xlane.f32.xlu0 %v1447
    %v1472 = vpop.xlane.xlu0 %1471
    %1473 = vadd.xlane.f32.xlu0 %v1448
    %v1474 = vpop.xlane.xlu0 %1473
    %1475 = vadd.xlane.f32.xlu0 %v1449
    %v1476 = vpop.xlane.xlu0 %1475
    %1477 = vadd.xlane.f32.xlu0 %v1450
    %v1478 = vpop.xlane.xlu0 %1477
    %1479 = vadd.xlane.f32.xlu0 %v1451
    %v1480 = vpop.xlane.xlu0 %1479
    %1481 = vadd.xlane.f32.xlu0 %v1452
    %v1482 = vpop.xlane.xlu0 %1481
    %1483 = vadd.xlane.f32.xlu0 %v1453
    %v1484 = vpop.xlane.xlu0 %1483
    %1485 = vadd.xlane.f32.xlu0 %v1454
    %v1486 = vpop.xlane.xlu0 %1485
    %v1503 = vlaneseq
    %v1504 = vand.u32 %v1503, 127
    %v1505 = vlaneseq
    %v1506 = vshrl.u32 %v1505, 7
    %v1507 = vsub.s32 %v1504, %v1506
    %v1508 = vrot.slane %v1456, %v1507
    %v1509 = vadd.s32 %v1504, 4294967288
    %v1510 = vlaneseq
    %v1511 = vshrl.u32 %v1510, 7
    %v1512 = vsub.s32 %v1509, %v1511
    %v1513 = vrot.slane %v1458, %v1512
    %vm1514 = vcmask 130112
    %v1515 = vsel %vm1514, %v1513, %v1508
    %v1516 = vadd.s32 %v1504, 4294967280
    %v1517 = vlaneseq
    %v1518 = vshrl.u32 %v1517, 7
    %v1519 = vsub.s32 %v1516, %v1518
    %v1520 = vrot.slane %v1460, %v1519
    %vm1521 = vcmask 195712
    %v1522 = vsel %vm1521, %v1520, %v1515
    %v1523 = vadd.s32 %v1504, 4294967272
    %v1524 = vlaneseq
    %v1525 = vshrl.u32 %v1524, 7
    %v1526 = vsub.s32 %v1523, %v1525
    %v1527 = vrot.slane %v1462, %v1526
    %vm1528 = vcmask 261312
    %v1529 = vsel %vm1528, %v1527, %v1522
    %v1530 = vadd.s32 %v1504, 4294967264
    %v1531 = vlaneseq
    %v1532 = vshrl.u32 %v1531, 7
    %v1533 = vsub.s32 %v1530, %v1532
    %v1534 = vrot.slane %v1464, %v1533
    %vm1535 = vcmask 326912
    %v1536 = vsel %vm1535, %v1534, %v1529
    %v1537 = vadd.s32 %v1504, 4294967256
    %v1538 = vlaneseq
    %v1539 = vshrl.u32 %v1538, 7
    %v1540 = vsub.s32 %v1537, %v1539
    %v1541 = vrot.slane %v1466, %v1540
    %vm1542 = vcmask 392512
    %v1543 = vsel %vm1542, %v1541, %v1536
    %v1544 = vadd.s32 %v1504, 4294967248
    %v1545 = vlaneseq
    %v1546 = vshrl.u32 %v1545, 7
    %v1547 = vsub.s32 %v1544, %v1546
    %v1548 = vrot.slane %v1468, %v1547
    %vm1549 = vcmask 458112
    %v1550 = vsel %vm1549, %v1548, %v1543
    %v1551 = vadd.s32 %v1504, 4294967240
    %v1552 = vlaneseq
    %v1553 = vshrl.u32 %v1552, 7
    %v1554 = vsub.s32 %v1551, %v1553
    %v1555 = vrot.slane %v1470, %v1554
    %vm1556 = vcmask 523712
    %v1557 = vsel %vm1556, %v1555, %v1550
    %v1558 = vadd.s32 %v1504, 4294967232
    %v1559 = vlaneseq
    %v1560 = vshrl.u32 %v1559, 7
    %v1561 = vsub.s32 %v1558, %v1560
    %v1562 = vrot.slane %v1472, %v1561
    %vm1563 = vcmask 589312
    %v1564 = vsel %vm1563, %v1562, %v1557
    %v1565 = vadd.s32 %v1504, 4294967224
    %v1566 = vlaneseq
    %v1567 = vshrl.u32 %v1566, 7
    %v1568 = vsub.s32 %v1565, %v1567
    %v1569 = vrot.slane %v1474, %v1568
    %vm1570 = vcmask 654912
    %v1571 = vsel %vm1570, %v1569, %v1564
    %v1572 = vadd.s32 %v1504, 4294967216
    %v1573 = vlaneseq
    %v1574 = vshrl.u32 %v1573, 7
    %v1575 = vsub.s32 %v1572, %v1574
    %v1576 = vrot.slane %v1476, %v1575
    %vm1577 = vcmask 720512
    %v1578 = vsel %vm1577, %v1576, %v1571
    %v1579 = vadd.s32 %v1504, 4294967208
    %v1580 = vlaneseq
    %v1581 = vshrl.u32 %v1580, 7
    %v1582 = vsub.s32 %v1579, %v1581
    %v1583 = vrot.slane %v1478, %v1582
    %vm1584 = vcmask 786112
    %v1585 = vsel %vm1584, %v1583, %v1578
    %v1586 = vadd.s32 %v1504, 4294967200
    %v1587 = vlaneseq
    %v1588 = vshrl.u32 %v1587, 7
    %v1589 = vsub.s32 %v1586, %v1588
    %v1590 = vrot.slane %v1480, %v1589
    %vm1591 = vcmask 851712
    %v1592 = vsel %vm1591, %v1590, %v1585
    %v1593 = vadd.s32 %v1504, 4294967192
    %v1594 = vlaneseq
    %v1595 = vshrl.u32 %v1594, 7
    %v1596 = vsub.s32 %v1593, %v1595
    %v1597 = vrot.slane %v1482, %v1596
    %vm1598 = vcmask 917312
    %v1599 = vsel %vm1598, %v1597, %v1592
    %v1600 = vadd.s32 %v1504, 4294967184
    %v1601 = vlaneseq
    %v1602 = vshrl.u32 %v1601, 7
    %v1603 = vsub.s32 %v1600, %v1602
    %v1604 = vrot.slane %v1484, %v1603
    %vm1605 = vcmask 982912
    %v1606 = vsel %vm1605, %v1604, %v1599
    %v1607 = vadd.s32 %v1504, 4294967176
    %v1608 = vlaneseq
    %v1609 = vshrl.u32 %v1608, 7
    %v1610 = vsub.s32 %v1607, %v1609
    %v1611 = vrot.slane %v1486, %v1610
    %vm1612 = vcmask 1048512
    %v1613 = vsel %vm1612, %v1611, %v1606
    %1615 = vst [vmem:[#allocation2] sm:$0x1] %v1613
    // Predicated region
    $region22: #{tpu_custom_call.1} parent=1 // pred_check
      _
    $region23: #{tpu_custom_call.1} parent=1 // pred_check_branch
      %1617 = sbr.rel (0) target = $region25
    $region24: #{tpu_custom_call.1} parent=1 // pred_region
      %s1619 = ssub.s32 16, 16
      %1620 = vsyncadd [#allocation3], %s1619
      %s1622 = sshll.u32 [#allocation2], 4
      %s1623 = int_to_ptr.vmem [resolvable:$true] %s1622
      %1625 = dma.vmem_to_hbm [thread:$0]  %s1623, 16, %s5, [#allocation3]
    $region25: #{tpu_custom_call.1} parent=1 // pred_fallthru
      _
    // Predicated region
    $region26: #{tpu_custom_call.1} parent=1 // pred_check
      _
    $region27: #{tpu_custom_call.1} parent=1 // pred_check_branch
      %1627 = sbr.rel (0) target = $region29
    $region28: #{tpu_custom_call.1} parent=1 // pred_region
      %1628 = dma.done [#allocation3], 16
    $region29: #{tpu_custom_call.1} parent=1 // pred_fallthru
      _
    %1629 = vsyncpa [#allocation3], 1

</llo_original>
